<compile_context>
chip_gen: v5e
topology: v5e:2x2
jax: 0.10.0
libtpu: 0.0.40
codegen_flags: <defaults>
</compile_context>

<pallas_src>
import functools
import math

import jax
import jax.numpy as jnp
from jax.experimental import pallas as pl
from jax.experimental.pallas import tpu as pltpu


# ----------------------------------------------------------------------------
# Pallas kernel: fused chain of  y = relu(y @ W_i + b_i)  (optional input normalization)
# ----------------------------------------------------------------------------
def _make_chain_kernel(num_convs, normalize):
    def kernel(*refs):
        x_ref = refs[0]
        out_ref = refs[-1]
        wb_refs = refs[1:-1]                      # alternating (w0, b0, w1, b1, ...)
        y = x_ref[...].astype(jnp.float32)
        if normalize:
            y = (y - 0.45) * (1.0 / 0.225)        # fused input normalization
        for i in range(num_convs):
            w = wb_refs[2 * i][...]               # (K_i, O_i)
            b = wb_refs[2 * i + 1][...]           # (1, O_i) broadcasts over rows
            y = jnp.dot(y, w, preferred_element_type=jnp.float32) + b
            y = jnp.maximum(y, 0.0)               # ReLU
        out_ref[...] = y.astype(out_ref.dtype)
    return kernel


def fused_conv_chain(x2d, weights, biases, *, normalize=False):
    """x2d: (M, K0); weights[i]: (K_i, O_i) pre-transposed; biases[i]: (1, O_i).

    Runs the whole relu(x @ W + b) chain in a single grid-less pallas_call with every operand
    resident as a full VMEM block (M <= 512, all operands < 1 MiB total, far under scoped VMEM
    on v5e/v6e/v7x). Mosaic pads the non-aligned K/N dims in-register for the MXU."""
    M = x2d.shape[0]
    out_dim = weights[-1].shape[1]
    kernel = _make_chain_kernel(len(weights), normalize)

    args = [x2d]
    for wt, b in zip(weights, biases):
        args.append(wt)
        args.append(b)

    vmem_spec = pl.BlockSpec(memory_space=pltpu.MemorySpace.VMEM)
    return pl.pallas_call(
        kernel,
        out_shape=jax.ShapeDtypeStruct((M, out_dim), jnp.float32),
        in_specs=[vmem_spec] * len(args),
        out_specs=vmem_spec,
    )(*args)


# ----------------------------------------------------------------------------
# Plain-JAX glue: pixel_unshuffle / window extraction / feature relayout
# ----------------------------------------------------------------------------
def pixel_unshuffle(x, scale):
    b, c, h, w = x.shape
    x = x.reshape(b, c, h // scale, scale, w // scale, scale)
    x = jnp.transpose(x, (0, 1, 3, 5, 2, 4))
    return x.reshape(b, c * scale * scale, h // scale, w // scale)


def _windows(x, K):
    """spatial_flatten + non-overlapping windows (Conv1d stride==kernel, no pad):
    (B, C, H, W) -> (B*P, K) with P = C*H*W // K."""
    B = x.shape[0]
    L = x.shape[1] * x.shape[2] * x.shape[3]
    P = L // K
    return x.reshape(B, L)[:, : P * K].reshape(B * P, K), P


def _emit_feature(y, B, P, C, h, w):
    """(B*P, C) rows-by-channels -> (B, C, h, w) NCHW (channel_recover)."""
    return jnp.transpose(y.reshape(B, P, C), (0, 2, 1)).reshape(B, C, h, w)


# ----------------------------------------------------------------------------
# Parameter construction (deterministic, synthetic; weights pre-transposed once)
# ----------------------------------------------------------------------------
def _init_conv1d(key, out_ch, in_ch, ksize):
    kw, kb = jax.random.split(key)
    fan_in = in_ch * ksize
    scale = 1.0 / math.sqrt(fan_in)
    w = jax.random.normal(kw, (out_ch, in_ch, ksize), jnp.float32) * scale
    b = jax.random.normal(kb, (out_ch,), jnp.float32) * scale
    # Pre-transpose once: (out, in, k) -> (in*k, out) matmul weight; bias -> (1, out).
    wt = jnp.transpose(w, (1, 2, 0)).reshape(in_ch * ksize, out_ch)
    return wt, b.reshape(1, out_ch)


def init_one_encoder_params(opts, key):
    channels = [(2 ** i) * opts["bottleneck_channel"]
                for i in range(opts["num_layers"] + 1)]
    keys = jax.random.split(key, opts["bottleneck_repeat"] + 2 * opts["num_layers"])
    ki = 0
    params = {"bottleneck": {"w": [], "b": []}, "layers": []}
    # Bottleneck: Conv1D(k=channel_in, 1->K0, stride=channel_in) then (repeat-1) pointwise K0->K0
    for i in range(opts["bottleneck_repeat"]):
        if i == 0:
            wt, b = _init_conv1d(keys[ki], opts["bottleneck_channel"], 1, opts["channel_in"])
        else:
            wt, b = _init_conv1d(keys[ki], opts["bottleneck_channel"],
                                 opts["bottleneck_channel"], 1)
        params["bottleneck"]["w"].append(wt)
        params["bottleneck"]["b"].append(b)
        ki += 1
    # Per-layer convs: windowed Conv1D(k=8*ch, 1->ch) then pointwise ch->ch
    for i in range(opts["num_layers"]):
        ch = channels[i + 1]
        w1, b1 = _init_conv1d(keys[ki], ch, 1, 8 * ch); ki += 1
        w2, b2 = _init_conv1d(keys[ki], ch, ch, 1); ki += 1
        params["layers"].append({"w": [w1, w2], "b": [b1, b2]})
    return params, channels


# ----------------------------------------------------------------------------
# OneEncoder forward
# ----------------------------------------------------------------------------
def one_encoder_forward(params, opts, channels, x):
    features = []
    B, _, H, W = x.shape
    bc = opts["bottleneck_channel"]

    # ---- Bottleneck: 3 convs (+ input normalization) fused into one kernel ----
    xw, P = _windows(x, opts["channel_in"])                       # (B*H*W, channel_in)
    y = fused_conv_chain(xw, params["bottleneck"]["w"], params["bottleneck"]["b"],
                         normalize=True)                          # (B*H*W, bc)
    x = _emit_feature(y, B, P, bc, H, W)                          # (B, bc, H, W)
    features.append(x)

    # ---- Pyramid layers: windowed conv + pointwise conv fused into one kernel each ----
    for i in range(opts["num_layers"]):
        x = pixel_unshuffle(x, 4)
        h, w = x.shape[2], x.shape[3]
        ch = channels[i + 1]
        xw, P = _windows(x, 8 * ch)                               # (B*h*w, 8*ch)
        lyr = params["layers"][i]
        y = fused_conv_chain(xw, lyr["w"], lyr["b"])              # (B*h*w, ch)
        x = _emit_feature(y, B, P, ch, h, w)                      # (B, ch, h, w)
        features.append(x)
    return features


# ----------------------------------------------------------------------------
# Main
# ----------------------------------------------------------------------------
if __name__ == "__main__":
    opts = {
        "channel_in": 3,
        "bottleneck_channel": 8,
        "bottleneck_repeat": 3,
        "num_layers": 2,
    }
    key = jax.random.PRNGKey(0)
    k_param, k_x = jax.random.split(key)
    params, channels = init_one_encoder_params(opts, k_param)

    # Input: (B=2, C=3, H=16, W=16); 16 / 4 / 4 -> spatial shrinks to 1x1 by layer 2.
    x = jax.random.normal(k_x, (2, 3, 16, 16), jnp.float32)

    fwd = jax.jit(functools.partial(one_encoder_forward, params, opts, channels))
    feats = jax.block_until_ready(fwd(x))

    expected_shapes = [(2, 8, 16, 16), (2, 16, 4, 4), (2, 32, 1, 1)]
    assert [tuple(f.shape) for f in feats] == expected_shapes, \
        [tuple(f.shape) for f in feats]
    assert all(bool(jnp.all(jnp.isfinite(f))) for f in feats)
    print("KERNEL_OK")
</pallas_src>

<mosaic_0001>
module attributes {stable_mosaic.version = 11 : i64} {
  func.func @kernel(%arg0: memref<512x3xf32, #tpu.memory_space<vmem>>, %arg1: memref<3x8xf32, #tpu.memory_space<vmem>>, %arg2: memref<1x8xf32, #tpu.memory_space<vmem>>, %arg3: memref<8x8xf32, #tpu.memory_space<vmem>>, %arg4: memref<1x8xf32, #tpu.memory_space<vmem>>, %arg5: memref<8x8xf32, #tpu.memory_space<vmem>>, %arg6: memref<1x8xf32, #tpu.memory_space<vmem>>, %arg7: memref<512x8xf32, #tpu.memory_space<vmem>>) attributes {dimension_semantics = [], scalar_prefetch = 0 : i64, scratch_operands = 0 : i64, tpu.core_type = #tpu.core_type<tc>} {
    %c0 = arith.constant 0 : index
    %c0_0 = arith.constant 0 : index
    %0 = vector.load %arg0[%c0, %c0_0] : memref<512x3xf32, #tpu.memory_space<vmem>>, vector<512x3xf32>
    %cst = arith.constant 4.500000e-01 : f32
    %1 = vector.broadcast %cst : f32 to vector<512x3xf32>
    %2 = arith.subf %0, %1 : vector<512x3xf32>
    %cst_1 = arith.constant 4.44444466 : f32
    %3 = vector.broadcast %cst_1 : f32 to vector<512x3xf32>
    %4 = arith.mulf %2, %3 : vector<512x3xf32>
    %c0_2 = arith.constant 0 : index
    %c0_3 = arith.constant 0 : index
    %5 = vector.load %arg1[%c0_2, %c0_3] : memref<3x8xf32, #tpu.memory_space<vmem>>, vector<3x8xf32>
    %c0_4 = arith.constant 0 : index
    %c0_5 = arith.constant 0 : index
    %6 = vector.load %arg2[%c0_4, %c0_5] : memref<1x8xf32, #tpu.memory_space<vmem>>, vector<1x8xf32>
    %cst_6 = arith.constant dense<0.000000e+00> : vector<512x8xf32>
    %7 = tpu.matmul %4, %5, %cst_6 {dimension_numbers = #tpu.dot_dimension_numbers<[1], [0], [0], [1], [0, 0, 1, 1], [], []>} : vector<512x3xf32>, vector<3x8xf32>, vector<512x8xf32> -> vector<512x8xf32>
    %8 = vector.broadcast %6 : vector<1x8xf32> to vector<512x8xf32>
    %9 = arith.addf %7, %8 : vector<512x8xf32>
    %cst_7 = arith.constant 0.000000e+00 : f32
    %10 = vector.broadcast %cst_7 : f32 to vector<512x8xf32>
    %11 = arith.maximumf %9, %10 : vector<512x8xf32>
    %c0_8 = arith.constant 0 : index
    %c0_9 = arith.constant 0 : index
    %12 = vector.load %arg3[%c0_8, %c0_9] : memref<8x8xf32, #tpu.memory_space<vmem>>, vector<8x8xf32>
    %c0_10 = arith.constant 0 : index
    %c0_11 = arith.constant 0 : index
    %13 = vector.load %arg4[%c0_10, %c0_11] : memref<1x8xf32, #tpu.memory_space<vmem>>, vector<1x8xf32>
    %cst_12 = arith.constant dense<0.000000e+00> : vector<512x8xf32>
    %14 = tpu.matmul %11, %12, %cst_12 {dimension_numbers = #tpu.dot_dimension_numbers<[1], [0], [0], [1], [0, 0, 1, 1], [], []>} : vector<512x8xf32>, vector<8x8xf32>, vector<512x8xf32> -> vector<512x8xf32>
    %15 = vector.broadcast %13 : vector<1x8xf32> to vector<512x8xf32>
    %16 = arith.addf %14, %15 : vector<512x8xf32>
    %cst_13 = arith.constant 0.000000e+00 : f32
    %17 = vector.broadcast %cst_13 : f32 to vector<512x8xf32>
    %18 = arith.maximumf %16, %17 : vector<512x8xf32>
    %c0_14 = arith.constant 0 : index
    %c0_15 = arith.constant 0 : index
    %19 = vector.load %arg5[%c0_14, %c0_15] : memref<8x8xf32, #tpu.memory_space<vmem>>, vector<8x8xf32>
    %c0_16 = arith.constant 0 : index
    %c0_17 = arith.constant 0 : index
    %20 = vector.load %arg6[%c0_16, %c0_17] : memref<1x8xf32, #tpu.memory_space<vmem>>, vector<1x8xf32>
    %cst_18 = arith.constant dense<0.000000e+00> : vector<512x8xf32>
    %21 = tpu.matmul %18, %19, %cst_18 {dimension_numbers = #tpu.dot_dimension_numbers<[1], [0], [0], [1], [0, 0, 1, 1], [], []>} : vector<512x8xf32>, vector<8x8xf32>, vector<512x8xf32> -> vector<512x8xf32>
    %22 = vector.broadcast %20 : vector<1x8xf32> to vector<512x8xf32>
    %23 = arith.addf %21, %22 : vector<512x8xf32>
    %cst_19 = arith.constant 0.000000e+00 : f32
    %24 = vector.broadcast %cst_19 : f32 to vector<512x8xf32>
    %25 = arith.maximumf %23, %24 : vector<512x8xf32>
    %c0_20 = arith.constant 0 : index
    %c0_21 = arith.constant 0 : index
    %26 = vector.load %arg7[%c0_20, %c0_21] : memref<512x8xf32, #tpu.memory_space<vmem>>, vector<512x8xf32>
    tpu.vector_store %arg7[%c0_20, %c0_21], %25 {strides = array<i32>} : memref<512x8xf32, #tpu.memory_space<vmem>>, vector<512x8xf32>,
    return
  }
}

module attributes {stable_mosaic.version = 11 : i64} {
  func.func @kernel(%arg0: memref<32x128xf32, #tpu.memory_space<vmem>>, %arg1: memref<128x16xf32, #tpu.memory_space<vmem>>, %arg2: memref<1x16xf32, #tpu.memory_space<vmem>>, %arg3: memref<16x16xf32, #tpu.memory_space<vmem>>, %arg4: memref<1x16xf32, #tpu.memory_space<vmem>>, %arg5: memref<32x16xf32, #tpu.memory_space<vmem>>) attributes {dimension_semantics = [], scalar_prefetch = 0 : i64, scratch_operands = 0 : i64, tpu.core_type = #tpu.core_type<tc>} {
    %c0 = arith.constant 0 : index
    %c0_0 = arith.constant 0 : index
    %0 = vector.load %arg0[%c0, %c0_0] : memref<32x128xf32, #tpu.memory_space<vmem>>, vector<32x128xf32>
    %c0_1 = arith.constant 0 : index
    %c0_2 = arith.constant 0 : index
    %1 = vector.load %arg1[%c0_1, %c0_2] : memref<128x16xf32, #tpu.memory_space<vmem>>, vector<128x16xf32>
    %c0_3 = arith.constant 0 : index
    %c0_4 = arith.constant 0 : index
    %2 = vector.load %arg2[%c0_3, %c0_4] : memref<1x16xf32, #tpu.memory_space<vmem>>, vector<1x16xf32>
    %cst = arith.constant dense<0.000000e+00> : vector<32x16xf32>
    %3 = tpu.matmul %0, %1, %cst {dimension_numbers = #tpu.dot_dimension_numbers<[1], [0], [0], [1], [0, 0, 1, 1], [], []>} : vector<32x128xf32>, vector<128x16xf32>, vector<32x16xf32> -> vector<32x16xf32>
    %4 = vector.broadcast %2 : vector<1x16xf32> to vector<32x16xf32>
    %5 = arith.addf %3, %4 : vector<32x16xf32>
    %cst_5 = arith.constant 0.000000e+00 : f32
    %6 = vector.broadcast %cst_5 : f32 to vector<32x16xf32>
    %7 = arith.maximumf %5, %6 : vector<32x16xf32>
    %c0_6 = arith.constant 0 : index
    %c0_7 = arith.constant 0 : index
    %8 = vector.load %arg3[%c0_6, %c0_7] : memref<16x16xf32, #tpu.memory_space<vmem>>, vector<16x16xf32>
    %c0_8 = arith.constant 0 : index
    %c0_9 = arith.constant 0 : index
    %9 = vector.load %arg4[%c0_8, %c0_9] : memref<1x16xf32, #tpu.memory_space<vmem>>, vector<1x16xf32>
    %cst_10 = arith.constant dense<0.000000e+00> : vector<32x16xf32>
    %10 = tpu.matmul %7, %8, %cst_10 {dimension_numbers = #tpu.dot_dimension_numbers<[1], [0], [0], [1], [0, 0, 1, 1], [], []>} : vector<32x16xf32>, vector<16x16xf32>, vector<32x16xf32> -> vector<32x16xf32>
    %11 = vector.broadcast %9 : vector<1x16xf32> to vector<32x16xf32>
    %12 = arith.addf %10, %11 : vector<32x16xf32>
    %cst_11 = arith.constant 0.000000e+00 : f32
    %13 = vector.broadcast %cst_11 : f32 to vector<32x16xf32>
    %14 = arith.maximumf %12, %13 : vector<32x16xf32>
    %c0_12 = arith.constant 0 : index
    %c0_13 = arith.constant 0 : index
    %15 = vector.load %arg5[%c0_12, %c0_13] : memref<32x16xf32, #tpu.memory_space<vmem>>, vector<32x16xf32>
    tpu.vector_store %arg5[%c0_12, %c0_13], %14 {strides = array<i32>} : memref<32x16xf32, #tpu.memory_space<vmem>>, vector<32x16xf32>,
    return
  }
}

module attributes {stable_mosaic.version = 11 : i64} {
  func.func @kernel(%arg0: memref<2x256xf32, #tpu.memory_space<vmem>>, %arg1: memref<256x32xf32, #tpu.memory_space<vmem>>, %arg2: memref<1x32xf32, #tpu.memory_space<vmem>>, %arg3: memref<32x32xf32, #tpu.memory_space<vmem>>, %arg4: memref<1x32xf32, #tpu.memory_space<vmem>>, %arg5: memref<2x32xf32, #tpu.memory_space<vmem>>) attributes {dimension_semantics = [], scalar_prefetch = 0 : i64, scratch_operands = 0 : i64, tpu.core_type = #tpu.core_type<tc>} {
    %c0 = arith.constant 0 : index
    %c0_0 = arith.constant 0 : index
    %0 = vector.load %arg0[%c0, %c0_0] : memref<2x256xf32, #tpu.memory_space<vmem>>, vector<2x256xf32>
    %c0_1 = arith.constant 0 : index
    %c0_2 = arith.constant 0 : index
    %1 = vector.load %arg1[%c0_1, %c0_2] : memref<256x32xf32, #tpu.memory_space<vmem>>, vector<256x32xf32>
    %c0_3 = arith.constant 0 : index
    %c0_4 = arith.constant 0 : index
    %2 = vector.load %arg2[%c0_3, %c0_4] : memref<1x32xf32, #tpu.memory_space<vmem>>, vector<1x32xf32>
    %cst = arith.constant dense<0.000000e+00> : vector<2x32xf32>
    %3 = tpu.matmul %0, %1, %cst {dimension_numbers = #tpu.dot_dimension_numbers<[1], [0], [0], [1], [0, 0, 1, 1], [], []>} : vector<2x256xf32>, vector<256x32xf32>, vector<2x32xf32> -> vector<2x32xf32>
    %4 = vector.broadcast %2 : vector<1x32xf32> to vector<2x32xf32>
    %5 = arith.addf %3, %4 : vector<2x32xf32>
    %cst_5 = arith.constant 0.000000e+00 : f32
    %6 = vector.broadcast %cst_5 : f32 to vector<2x32xf32>
    %7 = arith.maximumf %5, %6 : vector<2x32xf32>
    %c0_6 = arith.constant 0 : index
    %c0_7 = arith.constant 0 : index
    %8 = vector.load %arg3[%c0_6, %c0_7] : memref<32x32xf32, #tpu.memory_space<vmem>>, vector<32x32xf32>
    %c0_8 = arith.constant 0 : index
    %c0_9 = arith.constant 0 : index
    %9 = vector.load %arg4[%c0_8, %c0_9] : memref<1x32xf32, #tpu.memory_space<vmem>>, vector<1x32xf32>
    %cst_10 = arith.constant dense<0.000000e+00> : vector<2x32xf32>
    %10 = tpu.matmul %7, %8, %cst_10 {dimension_numbers = #tpu.dot_dimension_numbers<[1], [0], [0], [1], [0, 0, 1, 1], [], []>} : vector<2x32xf32>, vector<32x32xf32>, vector<2x32xf32> -> vector<2x32xf32>
    %11 = vector.broadcast %9 : vector<1x32xf32> to vector<2x32xf32>
    %12 = arith.addf %10, %11 : vector<2x32xf32>
    %cst_11 = arith.constant 0.000000e+00 : f32
    %13 = vector.broadcast %cst_11 : f32 to vector<2x32xf32>
    %14 = arith.maximumf %12, %13 : vector<2x32xf32>
    %c0_12 = arith.constant 0 : index
    %c0_13 = arith.constant 0 : index
    %15 = vector.load %arg5[%c0_12, %c0_13] : memref<2x32xf32, #tpu.memory_space<vmem>>, vector<2x32xf32>
    tpu.vector_store %arg5[%c0_12, %c0_13], %14 {strides = array<i32>} : memref<2x32xf32, #tpu.memory_space<vmem>>, vector<2x32xf32>,
    return
  }
}

</mosaic_0001>

<llo_original>
// kernel: one_encoder_forward.4
$region0: #{one_encoder_forward.4}
  #allocation0 [shape = 'u32[]', space=smem, size = 0x4, offset = 0x4, fixed_abs, tag = 'smem constant byte address 0x4 - core index']
  #allocation1 [shape = 'u32[72,128]{1,0:T(1,128)}', space=vmem, size = 0x9000, scoped, tag = 'internal scratch']
  %s0 = inlined_call_operand.vmem [shape: f32[32,128], index: 0, kind: input, shape index: {}]
  %s1 = inlined_call_operand.vmem [shape: f32[128,16], index: 1, kind: input, shape index: {}]
  %s2 = inlined_call_operand.vmem [shape: f32[1,16], index: 2, kind: input, shape index: {}]
  %s3 = inlined_call_operand.vmem [shape: f32[16,16], index: 3, kind: input, shape index: {}]
  %s4 = inlined_call_operand.vmem [shape: f32[1,16], index: 4, kind: input, shape index: {}]
  %s5 = inlined_call_operand.vmem [shape: f32[32,16], index: 5, kind: output, shape index: {}]
  %s6 = sld [smem:[#allocation0]]
  $region30: #{one_encoder_forward.4} parent=0
    _
  %s8 = ssub.s32 1, %s6
  %s9 = scalar_select 0, %s8, %s6
  // Predicated region
  $region2: #{one_encoder_forward.4} parent=0 // pred_check
    _
  $region3: #{one_encoder_forward.4} parent=0 // pred_check_branch
    %11 = sbr.rel (0) target = $region5
  $region4: #{one_encoder_forward.4} parent=0 // pred_region
    _
  $region5: #{one_encoder_forward.4} parent=0 // pred_fallthru
    _
  // Predicated region
  $region6: #{one_encoder_forward.4} parent=0 // pred_check
    _
  $region7: #{one_encoder_forward.4} parent=0 // pred_check_branch
    %13 = sbr.rel (0) target = $region9
  $region8: #{one_encoder_forward.4} parent=0 // pred_region
    _
  $region9: #{one_encoder_forward.4} parent=0 // pred_fallthru
    _
  // Predicated region
  $region10: #{one_encoder_forward.4} parent=0 // pred_check
    _
  $region11: #{one_encoder_forward.4} parent=0 // pred_check_branch
    %15 = sbr.rel (0) target = $region13
  $region12: #{one_encoder_forward.4} parent=0 // pred_region
    _
  $region13: #{one_encoder_forward.4} parent=0 // pred_fallthru
    _
  // Predicated region
  $region14: #{one_encoder_forward.4} parent=0 // pred_check
    _
  $region15: #{one_encoder_forward.4} parent=0 // pred_check_branch
    %17 = sbr.rel (0) target = $region17
  $region16: #{one_encoder_forward.4} parent=0 // pred_region
    _
  $region17: #{one_encoder_forward.4} parent=0 // pred_fallthru
    _
  // Predicated region
  $region18: #{one_encoder_forward.4} parent=0 // pred_check
    _
  $region19: #{one_encoder_forward.4} parent=0 // pred_check_branch
    %19 = sbr.rel (0) target = $region21
  $region20: #{one_encoder_forward.4} parent=0 // pred_region
    _
  $region21: #{one_encoder_forward.4} parent=0 // pred_fallthru
    _
  %v20 = vld [vmem:[%s0] sm:$0xff]
  %v21 = vld [vmem:[%s0 + $0x8] sm:$0xff]
  %v22 = vld [vmem:[%s0 + $0x10] sm:$0xff]
  %v23 = vld [vmem:[%s0 + $0x18] sm:$0xff]
  %v24 = vld [vmem:[%s1] sm:$0xff]
  %v25 = vld [vmem:[%s1 + $0x8] sm:$0xff]
  %v26 = vld [vmem:[%s1 + $0x10] sm:$0xff]
  %v27 = vld [vmem:[%s1 + $0x18] sm:$0xff]
  %v28 = vld [vmem:[%s1 + $0x20] sm:$0xff]
  %v29 = vld [vmem:[%s1 + $0x28] sm:$0xff]
  %v30 = vld [vmem:[%s1 + $0x30] sm:$0xff]
  %v31 = vld [vmem:[%s1 + $0x38] sm:$0xff]
  %v32 = vld [vmem:[%s1 + $0x40] sm:$0xff]
  %v33 = vld [vmem:[%s1 + $0x48] sm:$0xff]
  %v34 = vld [vmem:[%s1 + $0x50] sm:$0xff]
  %v35 = vld [vmem:[%s1 + $0x58] sm:$0xff]
  %v36 = vld [vmem:[%s1 + $0x60] sm:$0xff]
  %v37 = vld [vmem:[%s1 + $0x68] sm:$0xff]
  %v38 = vld [vmem:[%s1 + $0x70] sm:$0xff]
  %v39 = vld [vmem:[%s1 + $0x78] sm:$0xff]
  %v40 = vld [vmem:[%s2] sm:$0x1]
  %v42 = vperm.slane %v40, 0
  %44 = vmatpush.msra.mxu0 %v39
  %45 = vmatpush.msra.mxu0 %v38
  %46 = vmatpush.msra.mxu0 %v37
  %47 = vmatpush.msra.mxu0 %v36
  %48 = vmatpush.msra.mxu0 %v35
  %49 = vmatpush.msra.mxu0 %v34
  %50 = vmatpush.msra.mxu0 %v33
  %51 = vmatpush.msra.mxu0 %v32
  %52 = vmatpush.msra.mxu0 %v31
  %53 = vmatpush.msra.mxu0 %v30
  %54 = vmatpush.msra.mxu0 %v29
  %55 = vmatpush.msra.mxu0 %v28
  %56 = vmatpush.msra.mxu0 %v27
  %57 = vmatpush.msra.mxu0 %v26
  %58 = vmatpush.msra.mxu0 %v25
  %59 = vmatpush.msra.mxu0 %v24
  %60 = vmatmul.f32.gmra.mxu0 %v20
  %v61 = vpop.f32.mrf.mxu0
  %v62 = vadd.f32 %v42, %v61
  %63 = vmatmul.f32.gmra.mxu0 %v21
  %v64 = vpop.f32.mrf.mxu0
  %v65 = vadd.f32 %v42, %v64
  %66 = vmatmul.f32.gmra.mxu0 %v22
  %v67 = vpop.f32.mrf.mxu0
  %v68 = vadd.f32 %v42, %v67
  %69 = vmatmul.f32.gmra.mxu0 %v23
  %v70 = vpop.f32.mrf.mxu0
  %v71 = vadd.f32 %v42, %v70
  %72 = vdwg.mxu0
  %v73 = vmax.f32 %v62, 0.0
  %v74 = vmax.f32 %v65, 0.0
  %v75 = vmax.f32 %v68, 0.0
  %v76 = vmax.f32 %v71, 0.0
  %v77 = vld [vmem:[%s3] sm:$0xff]
  %v78 = vld [vmem:[%s3 + $0x8] sm:$0xff]
  %v79 = vld [vmem:[%s4] sm:$0x1]
  %v81 = vperm.slane %v79, 0
  %vm83 = vcmask 130048
  %v85 = vsel %vm83, %v73, 0
  %v88 = vsel %vm83, %v74, 0
  %v91 = vsel %vm83, %v75, 0
  %v94 = vsel %vm83, %v76, 0
  %96 = vmatpush.msra.mxu0 0.0
  %97 = vmatpush.msra.mxu0 0.0
  %98 = vmatpush.msra.mxu0 0.0
  %99 = vmatpush.msra.mxu0 0.0
  %100 = vmatpush.msra.mxu0 0.0
  %101 = vmatpush.msra.mxu0 0.0
  %102 = vmatpush.msra.mxu0 0.0
  %103 = vmatpush.msra.mxu0 0.0
  %104 = vmatpush.msra.mxu0 0.0
  %105 = vmatpush.msra.mxu0 0.0
  %106 = vmatpush.msra.mxu0 0.0
  %107 = vmatpush.msra.mxu0 0.0
  %108 = vmatpush.msra.mxu0 0.0
  %109 = vmatpush.msra.mxu0 0.0
  %110 = vmatpush.msra.mxu0 %v78
  %111 = vmatpush.msra.mxu0 %v77
  %112 = vmatmul.f32.gmra.mxu0 %v85
  %v113 = vpop.f32.mrf.mxu0
  %v114 = vadd.f32 %v81, %v113
  %115 = vmatmul.f32.gmra.mxu0 %v88
  %v116 = vpop.f32.mrf.mxu0
  %v117 = vadd.f32 %v81, %v116
  %118 = vmatmul.f32.gmra.mxu0 %v91
  %v119 = vpop.f32.mrf.mxu0
  %v120 = vadd.f32 %v81, %v119
  %121 = vmatmul.f32.gmra.mxu0 %v94
  %v122 = vpop.f32.mrf.mxu0
  %v123 = vadd.f32 %v81, %v122
  %124 = vdwg.mxu0
  %v125 = vmax.f32 %v114, 0.0
  %v126 = vmax.f32 %v117, 0.0
  %v127 = vmax.f32 %v120, 0.0
  %v128 = vmax.f32 %v123, 0.0
  %129 = vst.msk [vmem:[%s5] sm:$0xff] %vm83, %v125
  %130 = vst.msk [vmem:[%s5 + $0x8] sm:$0xff] %vm83, %v126
  %131 = vst.msk [vmem:[%s5 + $0x10] sm:$0xff] %vm83, %v127
  %132 = vst.msk [vmem:[%s5 + $0x18] sm:$0xff] %vm83, %v128
  // Predicated region
  $region22: #{one_encoder_forward.4} parent=0 // pred_check
    _
  $region23: #{one_encoder_forward.4} parent=0 // pred_check_branch
    %134 = sbr.rel (0) target = $region25
  $region24: #{one_encoder_forward.4} parent=0 // pred_region
    _
  $region25: #{one_encoder_forward.4} parent=0 // pred_fallthru
    _
  // Predicated region
  $region26: #{one_encoder_forward.4} parent=0 // pred_check
    _
  $region27: #{one_encoder_forward.4} parent=0 // pred_check_branch
    %136 = sbr.rel (0) target = $region29
  $region28: #{one_encoder_forward.4} parent=0 // pred_region
    _
  $region29: #{one_encoder_forward.4} parent=0 // pred_fallthru
    _

// kernel: one_encoder_forward.3
$region0: #{one_encoder_forward.3}
  #allocation0 [shape = 'u32[]', space=smem, size = 0x4, offset = 0x4, fixed_abs, tag = 'smem constant byte address 0x4 - core index']
  #allocation1 [shape = 'u32[72,128]{1,0:T(1,128)}', space=vmem, size = 0x9000, scoped, tag = 'internal scratch']
  %s0 = inlined_call_operand.vmem [shape: f32[512,3], index: 0, kind: input, shape index: {}]
  %s1 = inlined_call_operand.vmem [shape: f32[3,8], index: 1, kind: input, shape index: {}]
  %s2 = inlined_call_operand.vmem [shape: f32[1,8], index: 2, kind: input, shape index: {}]
  %s3 = inlined_call_operand.vmem [shape: f32[8,8], index: 3, kind: input, shape index: {}]
  %s4 = inlined_call_operand.vmem [shape: f32[1,8], index: 4, kind: input, shape index: {}]
  %s5 = inlined_call_operand.vmem [shape: f32[8,8], index: 5, kind: input, shape index: {}]
  %s6 = inlined_call_operand.vmem [shape: f32[1,8], index: 6, kind: input, shape index: {}]
  %s7 = inlined_call_operand.vmem [shape: f32[512,8], index: 7, kind: output, shape index: {}]
  %s8 = sld [smem:[#allocation0]]
  $region38: #{one_encoder_forward.3} parent=0
    _
  %s10 = ssub.s32 1, %s8
  %s11 = scalar_select 0, %s10, %s8
  // Predicated region
  $region2: #{one_encoder_forward.3} parent=0 // pred_check
    _
  $region3: #{one_encoder_forward.3} parent=0 // pred_check_branch
    %13 = sbr.rel (0) target = $region5
  $region4: #{one_encoder_forward.3} parent=0 // pred_region
    _
  $region5: #{one_encoder_forward.3} parent=0 // pred_fallthru
    _
  // Predicated region
  $region6: #{one_encoder_forward.3} parent=0 // pred_check
    _
  $region7: #{one_encoder_forward.3} parent=0 // pred_check_branch
    %15 = sbr.rel (0) target = $region9
  $region8: #{one_encoder_forward.3} parent=0 // pred_region
    _
  $region9: #{one_encoder_forward.3} parent=0 // pred_fallthru
    _
  // Predicated region
  $region10: #{one_encoder_forward.3} parent=0 // pred_check
    _
  $region11: #{one_encoder_forward.3} parent=0 // pred_check_branch
    %17 = sbr.rel (0) target = $region13
  $region12: #{one_encoder_forward.3} parent=0 // pred_region
    _
  $region13: #{one_encoder_forward.3} parent=0 // pred_fallthru
    _
  // Predicated region
  $region14: #{one_encoder_forward.3} parent=0 // pred_check
    _
  $region15: #{one_encoder_forward.3} parent=0 // pred_check_branch
    %19 = sbr.rel (0) target = $region17
  $region16: #{one_encoder_forward.3} parent=0 // pred_region
    _
  $region17: #{one_encoder_forward.3} parent=0 // pred_fallthru
    _
  // Predicated region
  $region18: #{one_encoder_forward.3} parent=0 // pred_check
    _
  $region19: #{one_encoder_forward.3} parent=0 // pred_check_branch
    %21 = sbr.rel (0) target = $region21
  $region20: #{one_encoder_forward.3} parent=0 // pred_region
    _
  $region21: #{one_encoder_forward.3} parent=0 // pred_fallthru
    _
  // Predicated region
  $region22: #{one_encoder_forward.3} parent=0 // pred_check
    _
  $region23: #{one_encoder_forward.3} parent=0 // pred_check_branch
    %23 = sbr.rel (0) target = $region25
  $region24: #{one_encoder_forward.3} parent=0 // pred_region
    _
  $region25: #{one_encoder_forward.3} parent=0 // pred_fallthru
    _
  // Predicated region
  $region26: #{one_encoder_forward.3} parent=0 // pred_check
    _
  $region27: #{one_encoder_forward.3} parent=0 // pred_check_branch
    %25 = sbr.rel (0) target = $region29
  $region28: #{one_encoder_forward.3} parent=0 // pred_region
    _
  $region29: #{one_encoder_forward.3} parent=0 // pred_fallthru
    _
  %v26 = vld [vmem:[%s0] sm:$0xff]
  %v27 = vld [vmem:[%s0 + $0x8] sm:$0xff]
  %v28 = vld [vmem:[%s0 + $0x10] sm:$0xff]
  %v29 = vld [vmem:[%s0 + $0x18] sm:$0xff]
  %v30 = vld [vmem:[%s0 + $0x20] sm:$0xff]
  %v31 = vld [vmem:[%s0 + $0x28] sm:$0xff]
  %v32 = vld [vmem:[%s0 + $0x30] sm:$0xff]
  %v33 = vld [vmem:[%s0 + $0x38] sm:$0xff]
  %v34 = vld [vmem:[%s0 + $0x40] sm:$0xff]
  %v35 = vld [vmem:[%s0 + $0x48] sm:$0xff]
  %v36 = vld [vmem:[%s0 + $0x50] sm:$0xff]
  %v37 = vld [vmem:[%s0 + $0x58] sm:$0xff]
  %v38 = vld [vmem:[%s0 + $0x60] sm:$0xff]
  %v39 = vld [vmem:[%s0 + $0x68] sm:$0xff]
  %v40 = vld [vmem:[%s0 + $0x70] sm:$0xff]
  %v41 = vld [vmem:[%s0 + $0x78] sm:$0xff]
  %v42 = vld [vmem:[%s0 + $0x80] sm:$0xff]
  %v43 = vld [vmem:[%s0 + $0x88] sm:$0xff]
  %v44 = vld [vmem:[%s0 + $0x90] sm:$0xff]
  %v45 = vld [vmem:[%s0 + $0x98] sm:$0xff]
  %v46 = vld [vmem:[%s0 + $0xa0] sm:$0xff]
  %v47 = vld [vmem:[%s0 + $0xa8] sm:$0xff]
  %v48 = vld [vmem:[%s0 + $0xb0] sm:$0xff]
  %v49 = vld [vmem:[%s0 + $0xb8] sm:$0xff]
  %v50 = vld [vmem:[%s0 + $0xc0] sm:$0xff]
  %v51 = vld [vmem:[%s0 + $0xc8] sm:$0xff]
  %v52 = vld [vmem:[%s0 + $0xd0] sm:$0xff]
  %v53 = vld [vmem:[%s0 + $0xd8] sm:$0xff]
  %v54 = vld [vmem:[%s0 + $0xe0] sm:$0xff]
  %v55 = vld [vmem:[%s0 + $0xe8] sm:$0xff]
  %v56 = vld [vmem:[%s0 + $0xf0] sm:$0xff]
  %v57 = vld [vmem:[%s0 + $0xf8] sm:$0xff]
  %v58 = vld [vmem:[%s0 + $0x100] sm:$0xff]
  %v59 = vld [vmem:[%s0 + $0x108] sm:$0xff]
  %v60 = vld [vmem:[%s0 + $0x110] sm:$0xff]
  %v61 = vld [vmem:[%s0 + $0x118] sm:$0xff]
  %v62 = vld [vmem:[%s0 + $0x120] sm:$0xff]
  %v63 = vld [vmem:[%s0 + $0x128] sm:$0xff]
  %v64 = vld [vmem:[%s0 + $0x130] sm:$0xff]
  %v65 = vld [vmem:[%s0 + $0x138] sm:$0xff]
  %v66 = vld [vmem:[%s0 + $0x140] sm:$0xff]
  %v67 = vld [vmem:[%s0 + $0x148] sm:$0xff]
  %v68 = vld [vmem:[%s0 + $0x150] sm:$0xff]
  %v69 = vld [vmem:[%s0 + $0x158] sm:$0xff]
  %v70 = vld [vmem:[%s0 + $0x160] sm:$0xff]
  %v71 = vld [vmem:[%s0 + $0x168] sm:$0xff]
  %v72 = vld [vmem:[%s0 + $0x170] sm:$0xff]
  %v73 = vld [vmem:[%s0 + $0x178] sm:$0xff]
  %v74 = vld [vmem:[%s0 + $0x180] sm:$0xff]
  %v75 = vld [vmem:[%s0 + $0x188] sm:$0xff]
  %v76 = vld [vmem:[%s0 + $0x190] sm:$0xff]
  %v77 = vld [vmem:[%s0 + $0x198] sm:$0xff]
  %v78 = vld [vmem:[%s0 + $0x1a0] sm:$0xff]
  %v79 = vld [vmem:[%s0 + $0x1a8] sm:$0xff]
  %v80 = vld [vmem:[%s0 + $0x1b0] sm:$0xff]
  %v81 = vld [vmem:[%s0 + $0x1b8] sm:$0xff]
  %v82 = vld [vmem:[%s0 + $0x1c0] sm:$0xff]
  %v83 = vld [vmem:[%s0 + $0x1c8] sm:$0xff]
  %v84 = vld [vmem:[%s0 + $0x1d0] sm:$0xff]
  %v85 = vld [vmem:[%s0 + $0x1d8] sm:$0xff]
  %v86 = vld [vmem:[%s0 + $0x1e0] sm:$0xff]
  %v87 = vld [vmem:[%s0 + $0x1e8] sm:$0xff]
  %v88 = vld [vmem:[%s0 + $0x1f0] sm:$0xff]
  %v89 = vld [vmem:[%s0 + $0x1f8] sm:$0xff]
  %v90 = vsub.f32 %v26, 0.45
  %v91 = vsub.f32 %v27, 0.45
  %v92 = vsub.f32 %v28, 0.45
  %v93 = vsub.f32 %v29, 0.45
  %v94 = vsub.f32 %v30, 0.45
  %v95 = vsub.f32 %v31, 0.45
  %v96 = vsub.f32 %v32, 0.45
  %v97 = vsub.f32 %v33, 0.45
  %v98 = vsub.f32 %v34, 0.45
  %v99 = vsub.f32 %v35, 0.45
  %v100 = vsub.f32 %v36, 0.45
  %v101 = vsub.f32 %v37, 0.45
  %v102 = vsub.f32 %v38, 0.45
  %v103 = vsub.f32 %v39, 0.45
  %v104 = vsub.f32 %v40, 0.45
  %v105 = vsub.f32 %v41, 0.45
  %v106 = vsub.f32 %v42, 0.45
  %v107 = vsub.f32 %v43, 0.45
  %v108 = vsub.f32 %v44, 0.45
  %v109 = vsub.f32 %v45, 0.45
  %v110 = vsub.f32 %v46, 0.45
  %v111 = vsub.f32 %v47, 0.45
  %v112 = vsub.f32 %v48, 0.45
  %v113 = vsub.f32 %v49, 0.45
  %v114 = vsub.f32 %v50, 0.45
  %v115 = vsub.f32 %v51, 0.45
  %v116 = vsub.f32 %v52, 0.45
  %v117 = vsub.f32 %v53, 0.45
  %v118 = vsub.f32 %v54, 0.45
  %v119 = vsub.f32 %v55, 0.45
  %v120 = vsub.f32 %v56, 0.45
  %v121 = vsub.f32 %v57, 0.45
  %v122 = vsub.f32 %v58, 0.45
  %v123 = vsub.f32 %v59, 0.45
  %v124 = vsub.f32 %v60, 0.45
  %v125 = vsub.f32 %v61, 0.45
  %v126 = vsub.f32 %v62, 0.45
  %v127 = vsub.f32 %v63, 0.45
  %v128 = vsub.f32 %v64, 0.45
  %v129 = vsub.f32 %v65, 0.45
  %v130 = vsub.f32 %v66, 0.45
  %v131 = vsub.f32 %v67, 0.45
  %v132 = vsub.f32 %v68, 0.45
  %v133 = vsub.f32 %v69, 0.45
  %v134 = vsub.f32 %v70, 0.45
  %v135 = vsub.f32 %v71, 0.45
  %v136 = vsub.f32 %v72, 0.45
  %v137 = vsub.f32 %v73, 0.45
  %v138 = vsub.f32 %v74, 0.45
  %v139 = vsub.f32 %v75, 0.45
  %v140 = vsub.f32 %v76, 0.45
  %v141 = vsub.f32 %v77, 0.45
  %v142 = vsub.f32 %v78, 0.45
  %v143 = vsub.f32 %v79, 0.45
  %v144 = vsub.f32 %v80, 0.45
  %v145 = vsub.f32 %v81, 0.45
  %v146 = vsub.f32 %v82, 0.45
  %v147 = vsub.f32 %v83, 0.45
  %v148 = vsub.f32 %v84, 0.45
  %v149 = vsub.f32 %v85, 0.45
  %v150 = vsub.f32 %v86, 0.45
  %v151 = vsub.f32 %v87, 0.45
  %v152 = vsub.f32 %v88, 0.45
  %v153 = vsub.f32 %v89, 0.45
  %v154 = vmul.f32 %v90, 4.4444447
  %v155 = vmul.f32 %v91, 4.4444447
  %v156 = vmul.f32 %v92, 4.4444447
  %v157 = vmul.f32 %v93, 4.4444447
  %v158 = vmul.f32 %v94, 4.4444447
  %v159 = vmul.f32 %v95, 4.4444447
  %v160 = vmul.f32 %v96, 4.4444447
  %v161 = vmul.f32 %v97, 4.4444447
  %v162 = vmul.f32 %v98, 4.4444447
  %v163 = vmul.f32 %v99, 4.4444447
  %v164 = vmul.f32 %v100, 4.4444447
  %v165 = vmul.f32 %v101, 4.4444447
  %v166 = vmul.f32 %v102, 4.4444447
  %v167 = vmul.f32 %v103, 4.4444447
  %v168 = vmul.f32 %v104, 4.4444447
  %v169 = vmul.f32 %v105, 4.4444447
  %v170 = vmul.f32 %v106, 4.4444447
  %v171 = vmul.f32 %v107, 4.4444447
  %v172 = vmul.f32 %v108, 4.4444447
  %v173 = vmul.f32 %v109, 4.4444447
  %v174 = vmul.f32 %v110, 4.4444447
  %v175 = vmul.f32 %v111, 4.4444447
  %v176 = vmul.f32 %v112, 4.4444447
  %v177 = vmul.f32 %v113, 4.4444447
  %v178 = vmul.f32 %v114, 4.4444447
  %v179 = vmul.f32 %v115, 4.4444447
  %v180 = vmul.f32 %v116, 4.4444447
  %v181 = vmul.f32 %v117, 4.4444447
  %v182 = vmul.f32 %v118, 4.4444447
  %v183 = vmul.f32 %v119, 4.4444447
  %v184 = vmul.f32 %v120, 4.4444447
  %v185 = vmul.f32 %v121, 4.4444447
  %v186 = vmul.f32 %v122, 4.4444447
  %v187 = vmul.f32 %v123, 4.4444447
  %v188 = vmul.f32 %v124, 4.4444447
  %v189 = vmul.f32 %v125, 4.4444447
  %v190 = vmul.f32 %v126, 4.4444447
  %v191 = vmul.f32 %v127, 4.4444447
  %v192 = vmul.f32 %v128, 4.4444447
  %v193 = vmul.f32 %v129, 4.4444447
  %v194 = vmul.f32 %v130, 4.4444447
  %v195 = vmul.f32 %v131, 4.4444447
  %v196 = vmul.f32 %v132, 4.4444447
  %v197 = vmul.f32 %v133, 4.4444447
  %v198 = vmul.f32 %v134, 4.4444447
  %v199 = vmul.f32 %v135, 4.4444447
  %v200 = vmul.f32 %v136, 4.4444447
  %v201 = vmul.f32 %v137, 4.4444447
  %v202 = vmul.f32 %v138, 4.4444447
  %v203 = vmul.f32 %v139, 4.4444447
  %v204 = vmul.f32 %v140, 4.4444447
  %v205 = vmul.f32 %v141, 4.4444447
  %v206 = vmul.f32 %v142, 4.4444447
  %v207 = vmul.f32 %v143, 4.4444447
  %v208 = vmul.f32 %v144, 4.4444447
  %v209 = vmul.f32 %v145, 4.4444447
  %v210 = vmul.f32 %v146, 4.4444447
  %v211 = vmul.f32 %v147, 4.4444447
  %v212 = vmul.f32 %v148, 4.4444447
  %v213 = vmul.f32 %v149, 4.4444447
  %v214 = vmul.f32 %v150, 4.4444447
  %v215 = vmul.f32 %v151, 4.4444447
  %v216 = vmul.f32 %v152, 4.4444447
  %v217 = vmul.f32 %v153, 4.4444447
  %v218 = vld [vmem:[%s1] sm:$0x7]
  %v219 = vld [vmem:[%s2] sm:$0x1]
  %v221 = vperm.slane %v219, 0
  %vm223 = vcmask 23552
  %v225 = vsel %vm223, %v154, 0
  %v228 = vsel %vm223, %v155, 0
  %v231 = vsel %vm223, %v156, 0
  %v234 = vsel %vm223, %v157, 0
  %v237 = vsel %vm223, %v158, 0
  %v240 = vsel %vm223, %v159, 0
  %v243 = vsel %vm223, %v160, 0
  %v246 = vsel %vm223, %v161, 0
  %v249 = vsel %vm223, %v162, 0
  %v252 = vsel %vm223, %v163, 0
  %v255 = vsel %vm223, %v164, 0
  %v258 = vsel %vm223, %v165, 0
  %v261 = vsel %vm223, %v166, 0
  %v264 = vsel %vm223, %v167, 0
  %v267 = vsel %vm223, %v168, 0
  %v270 = vsel %vm223, %v169, 0
  %v273 = vsel %vm223, %v170, 0
  %v276 = vsel %vm223, %v171, 0
  %v279 = vsel %vm223, %v172, 0
  %v282 = vsel %vm223, %v173, 0
  %v285 = vsel %vm223, %v174, 0
  %v288 = vsel %vm223, %v175, 0
  %v291 = vsel %vm223, %v176, 0
  %v294 = vsel %vm223, %v177, 0
  %v297 = vsel %vm223, %v178, 0
  %v300 = vsel %vm223, %v179, 0
  %v303 = vsel %vm223, %v180, 0
  %v306 = vsel %vm223, %v181, 0
  %v309 = vsel %vm223, %v182, 0
  %v312 = vsel %vm223, %v183, 0
  %v315 = vsel %vm223, %v184, 0
  %v318 = vsel %vm223, %v185, 0
  %v321 = vsel %vm223, %v186, 0
  %v324 = vsel %vm223, %v187, 0
  %v327 = vsel %vm223, %v188, 0
  %v330 = vsel %vm223, %v189, 0
  %v333 = vsel %vm223, %v190, 0
  %v336 = vsel %vm223, %v191, 0
  %v339 = vsel %vm223, %v192, 0
  %v342 = vsel %vm223, %v193, 0
  %v345 = vsel %vm223, %v194, 0
  %v348 = vsel %vm223, %v195, 0
  %v351 = vsel %vm223, %v196, 0
  %v354 = vsel %vm223, %v197, 0
  %v357 = vsel %vm223, %v198, 0
  %v360 = vsel %vm223, %v199, 0
  %v363 = vsel %vm223, %v200, 0
  %v366 = vsel %vm223, %v201, 0
  %v369 = vsel %vm223, %v202, 0
  %v372 = vsel %vm223, %v203, 0
  %v375 = vsel %vm223, %v204, 0
  %v378 = vsel %vm223, %v205, 0
  %v381 = vsel %vm223, %v206, 0
  %v384 = vsel %vm223, %v207, 0
  %v387 = vsel %vm223, %v208, 0
  %v390 = vsel %vm223, %v209, 0
  %v393 = vsel %vm223, %v210, 0
  %v396 = vsel %vm223, %v211, 0
  %v399 = vsel %vm223, %v212, 0
  %v402 = vsel %vm223, %v213, 0
  %v405 = vsel %vm223, %v214, 0
  %v408 = vsel %vm223, %v215, 0
  %v411 = vsel %vm223, %v216, 0
  %v414 = vsel %vm223, %v217, 0
  %vm416 = vcmask 1042432
  %v418 = vsel %vm416, %v218, 0
  %420 = vmatpush.msra.mxu0 0.0
  %421 = vmatpush.msra.mxu0 0.0
  %422 = vmatpush.msra.mxu0 0.0
  %423 = vmatpush.msra.mxu0 0.0
  %424 = vmatpush.msra.mxu0 0.0
  %425 = vmatpush.msra.mxu0 0.0
  %426 = vmatpush.msra.mxu0 0.0
  %427 = vmatpush.msra.mxu0 0.0
  %428 = vmatpush.msra.mxu0 0.0
  %429 = vmatpush.msra.mxu0 0.0
  %430 = vmatpush.msra.mxu0 0.0
  %431 = vmatpush.msra.mxu0 0.0
  %432 = vmatpush.msra.mxu0 0.0
  %433 = vmatpush.msra.mxu0 0.0
  %434 = vmatpush.msra.mxu0 0.0
  %435 = vmatpush.msra.mxu0 %v418
  %436 = vmatmul.f32.gmra.mxu0 %v225
  %v437 = vpop.f32.mrf.mxu0
  %v438 = vadd.f32 %v221, %v437
  %439 = vmatmul.f32.gmra.mxu0 %v228
  %v440 = vpop.f32.mrf.mxu0
  %v441 = vadd.f32 %v221, %v440
  %442 = vmatmul.f32.gmra.mxu0 %v231
  %v443 = vpop.f32.mrf.mxu0
  %v444 = vadd.f32 %v221, %v443
  %445 = vmatmul.f32.gmra.mxu0 %v234
  %v446 = vpop.f32.mrf.mxu0
  %v447 = vadd.f32 %v221, %v446
  %448 = vmatmul.f32.gmra.mxu0 %v237
  %v449 = vpop.f32.mrf.mxu0
  %v450 = vadd.f32 %v221, %v449
  %451 = vmatmul.f32.gmra.mxu0 %v240
  %v452 = vpop.f32.mrf.mxu0
  %v453 = vadd.f32 %v221, %v452
  %454 = vmatmul.f32.gmra.mxu0 %v243
  %v455 = vpop.f32.mrf.mxu0
  %v456 = vadd.f32 %v221, %v455
  %457 = vmatmul.f32.gmra.mxu0 %v246
  %v458 = vpop.f32.mrf.mxu0
  %v459 = vadd.f32 %v221, %v458
  %460 = vmatmul.f32.gmra.mxu0 %v249
  %v461 = vpop.f32.mrf.mxu0
  %v462 = vadd.f32 %v221, %v461
  %463 = vmatmul.f32.gmra.mxu0 %v252
  %v464 = vpop.f32.mrf.mxu0
  %v465 = vadd.f32 %v221, %v464
  %466 = vmatmul.f32.gmra.mxu0 %v255
  %v467 = vpop.f32.mrf.mxu0
  %v468 = vadd.f32 %v221, %v467
  %469 = vmatmul.f32.gmra.mxu0 %v258
  %v470 = vpop.f32.mrf.mxu0
  %v471 = vadd.f32 %v221, %v470
  %472 = vmatmul.f32.gmra.mxu0 %v261
  %v473 = vpop.f32.mrf.mxu0
  %v474 = vadd.f32 %v221, %v473
  %475 = vmatmul.f32.gmra.mxu0 %v264
  %v476 = vpop.f32.mrf.mxu0
  %v477 = vadd.f32 %v221, %v476
  %478 = vmatmul.f32.gmra.mxu0 %v267
  %v479 = vpop.f32.mrf.mxu0
  %v480 = vadd.f32 %v221, %v479
  %481 = vmatmul.f32.gmra.mxu0 %v270
  %v482 = vpop.f32.mrf.mxu0
  %v483 = vadd.f32 %v221, %v482
  %484 = vmatmul.f32.gmra.mxu0 %v273
  %v485 = vpop.f32.mrf.mxu0
  %v486 = vadd.f32 %v221, %v485
  %487 = vmatmul.f32.gmra.mxu0 %v276
  %v488 = vpop.f32.mrf.mxu0
  %v489 = vadd.f32 %v221, %v488
  %490 = vmatmul.f32.gmra.mxu0 %v279
  %v491 = vpop.f32.mrf.mxu0
  %v492 = vadd.f32 %v221, %v491
  %493 = vmatmul.f32.gmra.mxu0 %v282
  %v494 = vpop.f32.mrf.mxu0
  %v495 = vadd.f32 %v221, %v494
  %496 = vmatmul.f32.gmra.mxu0 %v285
  %v497 = vpop.f32.mrf.mxu0
  %v498 = vadd.f32 %v221, %v497
  %499 = vmatmul.f32.gmra.mxu0 %v288
  %v500 = vpop.f32.mrf.mxu0
  %v501 = vadd.f32 %v221, %v500
  %502 = vmatmul.f32.gmra.mxu0 %v291
  %v503 = vpop.f32.mrf.mxu0
  %v504 = vadd.f32 %v221, %v503
  %505 = vmatmul.f32.gmra.mxu0 %v294
  %v506 = vpop.f32.mrf.mxu0
  %v507 = vadd.f32 %v221, %v506
  %508 = vmatmul.f32.gmra.mxu0 %v297
  %v509 = vpop.f32.mrf.mxu0
  %v510 = vadd.f32 %v221, %v509
  %511 = vmatmul.f32.gmra.mxu0 %v300
  %v512 = vpop.f32.mrf.mxu0
  %v513 = vadd.f32 %v221, %v512
  %514 = vmatmul.f32.gmra.mxu0 %v303
  %v515 = vpop.f32.mrf.mxu0
  %v516 = vadd.f32 %v221, %v515
  %517 = vmatmul.f32.gmra.mxu0 %v306
  %v518 = vpop.f32.mrf.mxu0
  %v519 = vadd.f32 %v221, %v518
  %520 = vmatmul.f32.gmra.mxu0 %v309
  %v521 = vpop.f32.mrf.mxu0
  %v522 = vadd.f32 %v221, %v521
  %523 = vmatmul.f32.gmra.mxu0 %v312
  %v524 = vpop.f32.mrf.mxu0
  %v525 = vadd.f32 %v221, %v524
  %526 = vmatmul.f32.gmra.mxu0 %v315
  %v527 = vpop.f32.mrf.mxu0
  %v528 = vadd.f32 %v221, %v527
  %529 = vmatmul.f32.gmra.mxu0 %v318
  %v530 = vpop.f32.mrf.mxu0
  %v531 = vadd.f32 %v221, %v530
  %532 = vmatmul.f32.gmra.mxu0 %v321
  %v533 = vpop.f32.mrf.mxu0
  %v534 = vadd.f32 %v221, %v533
  %535 = vmatmul.f32.gmra.mxu0 %v324
  %v536 = vpop.f32.mrf.mxu0
  %v537 = vadd.f32 %v221, %v536
  %538 = vmatmul.f32.gmra.mxu0 %v327
  %v539 = vpop.f32.mrf.mxu0
  %v540 = vadd.f32 %v221, %v539
  %541 = vmatmul.f32.gmra.mxu0 %v330
  %v542 = vpop.f32.mrf.mxu0
  %v543 = vadd.f32 %v221, %v542
  %544 = vmatmul.f32.gmra.mxu0 %v333
  %v545 = vpop.f32.mrf.mxu0
  %v546 = vadd.f32 %v221, %v545
  %547 = vmatmul.f32.gmra.mxu0 %v336
  %v548 = vpop.f32.mrf.mxu0
  %v549 = vadd.f32 %v221, %v548
  %550 = vmatmul.f32.gmra.mxu0 %v339
  %v551 = vpop.f32.mrf.mxu0
  %v552 = vadd.f32 %v221, %v551
  %553 = vmatmul.f32.gmra.mxu0 %v342
  %v554 = vpop.f32.mrf.mxu0
  %v555 = vadd.f32 %v221, %v554
  %556 = vmatmul.f32.gmra.mxu0 %v345
  %v557 = vpop.f32.mrf.mxu0
  %v558 = vadd.f32 %v221, %v557
  %559 = vmatmul.f32.gmra.mxu0 %v348
  %v560 = vpop.f32.mrf.mxu0
  %v561 = vadd.f32 %v221, %v560
  %562 = vmatmul.f32.gmra.mxu0 %v351
  %v563 = vpop.f32.mrf.mxu0
  %v564 = vadd.f32 %v221, %v563
  %565 = vmatmul.f32.gmra.mxu0 %v354
  %v566 = vpop.f32.mrf.mxu0
  %v567 = vadd.f32 %v221, %v566
  %568 = vmatmul.f32.gmra.mxu0 %v357
  %v569 = vpop.f32.mrf.mxu0
  %v570 = vadd.f32 %v221, %v569
  %571 = vmatmul.f32.gmra.mxu0 %v360
  %v572 = vpop.f32.mrf.mxu0
  %v573 = vadd.f32 %v221, %v572
  %574 = vmatmul.f32.gmra.mxu0 %v363
  %v575 = vpop.f32.mrf.mxu0
  %v576 = vadd.f32 %v221, %v575
  %577 = vmatmul.f32.gmra.mxu0 %v366
  %v578 = vpop.f32.mrf.mxu0
  %v579 = vadd.f32 %v221, %v578
  %580 = vmatmul.f32.gmra.mxu0 %v369
  %v581 = vpop.f32.mrf.mxu0
  %v582 = vadd.f32 %v221, %v581
  %583 = vmatmul.f32.gmra.mxu0 %v372
  %v584 = vpop.f32.mrf.mxu0
  %v585 = vadd.f32 %v221, %v584
  %586 = vmatmul.f32.gmra.mxu0 %v375
  %v587 = vpop.f32.mrf.mxu0
  %v588 = vadd.f32 %v221, %v587
  %589 = vmatmul.f32.gmra.mxu0 %v378
  %v590 = vpop.f32.mrf.mxu0
  %v591 = vadd.f32 %v221, %v590
  %592 = vmatmul.f32.gmra.mxu0 %v381
  %v593 = vpop.f32.mrf.mxu0
  %v594 = vadd.f32 %v221, %v593
  %595 = vmatmul.f32.gmra.mxu0 %v384
  %v596 = vpop.f32.mrf.mxu0
  %v597 = vadd.f32 %v221, %v596
  %598 = vmatmul.f32.gmra.mxu0 %v387
  %v599 = vpop.f32.mrf.mxu0
  %v600 = vadd.f32 %v221, %v599
  %601 = vmatmul.f32.gmra.mxu0 %v390
  %v602 = vpop.f32.mrf.mxu0
  %v603 = vadd.f32 %v221, %v602
  %604 = vmatmul.f32.gmra.mxu0 %v393
  %v605 = vpop.f32.mrf.mxu0
  %v606 = vadd.f32 %v221, %v605
  %607 = vmatmul.f32.gmra.mxu0 %v396
  %v608 = vpop.f32.mrf.mxu0
  %v609 = vadd.f32 %v221, %v608
  %610 = vmatmul.f32.gmra.mxu0 %v399
  %v611 = vpop.f32.mrf.mxu0
  %v612 = vadd.f32 %v221, %v611
  %613 = vmatmul.f32.gmra.mxu0 %v402
  %v614 = vpop.f32.mrf.mxu0
  %v615 = vadd.f32 %v221, %v614
  %616 = vmatmul.f32.gmra.mxu0 %v405
  %v617 = vpop.f32.mrf.mxu0
  %v618 = vadd.f32 %v221, %v617
  %619 = vmatmul.f32.gmra.mxu0 %v408
  %v620 = vpop.f32.mrf.mxu0
  %v621 = vadd.f32 %v221, %v620
  %622 = vmatmul.f32.gmra.mxu0 %v411
  %v623 = vpop.f32.mrf.mxu0
  %v624 = vadd.f32 %v221, %v623
  %625 = vmatmul.f32.gmra.mxu0 %v414
  %v626 = vpop.f32.mrf.mxu0
  %v627 = vadd.f32 %v221, %v626
  %628 = vdwg.mxu0
  %v629 = vmax.f32 %v438, 0.0
  %v630 = vmax.f32 %v441, 0.0
  %v631 = vmax.f32 %v444, 0.0
  %v632 = vmax.f32 %v447, 0.0
  %v633 = vmax.f32 %v450, 0.0
  %v634 = vmax.f32 %v453, 0.0
  %v635 = vmax.f32 %v456, 0.0
  %v636 = vmax.f32 %v459, 0.0
  %v637 = vmax.f32 %v462, 0.0
  %v638 = vmax.f32 %v465, 0.0
  %v639 = vmax.f32 %v468, 0.0
  %v640 = vmax.f32 %v471, 0.0
  %v641 = vmax.f32 %v474, 0.0
  %v642 = vmax.f32 %v477, 0.0
  %v643 = vmax.f32 %v480, 0.0
  %v644 = vmax.f32 %v483, 0.0
  %v645 = vmax.f32 %v486, 0.0
  %v646 = vmax.f32 %v489, 0.0
  %v647 = vmax.f32 %v492, 0.0
  %v648 = vmax.f32 %v495, 0.0
  %v649 = vmax.f32 %v498, 0.0
  %v650 = vmax.f32 %v501, 0.0
  %v651 = vmax.f32 %v504, 0.0
  %v652 = vmax.f32 %v507, 0.0
  %v653 = vmax.f32 %v510, 0.0
  %v654 = vmax.f32 %v513, 0.0
  %v655 = vmax.f32 %v516, 0.0
  %v656 = vmax.f32 %v519, 0.0
  %v657 = vmax.f32 %v522, 0.0
  %v658 = vmax.f32 %v525, 0.0
  %v659 = vmax.f32 %v528, 0.0
  %v660 = vmax.f32 %v531, 0.0
  %v661 = vmax.f32 %v534, 0.0
  %v662 = vmax.f32 %v537, 0.0
  %v663 = vmax.f32 %v540, 0.0
  %v664 = vmax.f32 %v543, 0.0
  %v665 = vmax.f32 %v546, 0.0
  %v666 = vmax.f32 %v549, 0.0
  %v667 = vmax.f32 %v552, 0.0
  %v668 = vmax.f32 %v555, 0.0
  %v669 = vmax.f32 %v558, 0.0
  %v670 = vmax.f32 %v561, 0.0
  %v671 = vmax.f32 %v564, 0.0
  %v672 = vmax.f32 %v567, 0.0
  %v673 = vmax.f32 %v570, 0.0
  %v674 = vmax.f32 %v573, 0.0
  %v675 = vmax.f32 %v576, 0.0
  %v676 = vmax.f32 %v579, 0.0
  %v677 = vmax.f32 %v582, 0.0
  %v678 = vmax.f32 %v585, 0.0
  %v679 = vmax.f32 %v588, 0.0
  %v680 = vmax.f32 %v591, 0.0
  %v681 = vmax.f32 %v594, 0.0
  %v682 = vmax.f32 %v597, 0.0
  %v683 = vmax.f32 %v600, 0.0
  %v684 = vmax.f32 %v603, 0.0
  %v685 = vmax.f32 %v606, 0.0
  %v686 = vmax.f32 %v609, 0.0
  %v687 = vmax.f32 %v612, 0.0
  %v688 = vmax.f32 %v615, 0.0
  %v689 = vmax.f32 %v618, 0.0
  %v690 = vmax.f32 %v621, 0.0
  %v691 = vmax.f32 %v624, 0.0
  %v692 = vmax.f32 %v627, 0.0
  %v693 = vld [vmem:[%s3] sm:$0xff]
  %v694 = vld [vmem:[%s4] sm:$0x1]
  %v696 = vperm.slane %v694, 0
  %vm698 = vcmask 64512
  %v700 = vsel %vm698, %v629, 0
  %v703 = vsel %vm698, %v630, 0
  %v706 = vsel %vm698, %v631, 0
  %v709 = vsel %vm698, %v632, 0
  %v712 = vsel %vm698, %v633, 0
  %v715 = vsel %vm698, %v634, 0
  %v718 = vsel %vm698, %v635, 0
  %v721 = vsel %vm698, %v636, 0
  %v724 = vsel %vm698, %v637, 0
  %v727 = vsel %vm698, %v638, 0
  %v730 = vsel %vm698, %v639, 0
  %v733 = vsel %vm698, %v640, 0
  %v736 = vsel %vm698, %v641, 0
  %v739 = vsel %vm698, %v642, 0
  %v742 = vsel %vm698, %v643, 0
  %v745 = vsel %vm698, %v644, 0
  %v748 = vsel %vm698, %v645, 0
  %v751 = vsel %vm698, %v646, 0
  %v754 = vsel %vm698, %v647, 0
  %v757 = vsel %vm698, %v648, 0
  %v760 = vsel %vm698, %v649, 0
  %v763 = vsel %vm698, %v650, 0
  %v766 = vsel %vm698, %v651, 0
  %v769 = vsel %vm698, %v652, 0
  %v772 = vsel %vm698, %v653, 0
  %v775 = vsel %vm698, %v654, 0
  %v778 = vsel %vm698, %v655, 0
  %v781 = vsel %vm698, %v656, 0
  %v784 = vsel %vm698, %v657, 0
  %v787 = vsel %vm698, %v658, 0
  %v790 = vsel %vm698, %v659, 0
  %v793 = vsel %vm698, %v660, 0
  %v796 = vsel %vm698, %v661, 0
  %v799 = vsel %vm698, %v662, 0
  %v802 = vsel %vm698, %v663, 0
  %v805 = vsel %vm698, %v664, 0
  %v808 = vsel %vm698, %v665, 0
  %v811 = vsel %vm698, %v666, 0
  %v814 = vsel %vm698, %v667, 0
  %v817 = vsel %vm698, %v668, 0
  %v820 = vsel %vm698, %v669, 0
  %v823 = vsel %vm698, %v670, 0
  %v826 = vsel %vm698, %v671, 0
  %v829 = vsel %vm698, %v672, 0
  %v832 = vsel %vm698, %v673, 0
  %v835 = vsel %vm698, %v674, 0
  %v838 = vsel %vm698, %v675, 0
  %v841 = vsel %vm698, %v676, 0
  %v844 = vsel %vm698, %v677, 0
  %v847 = vsel %vm698, %v678, 0
  %v850 = vsel %vm698, %v679, 0
  %v853 = vsel %vm698, %v680, 0
  %v856 = vsel %vm698, %v681, 0
  %v859 = vsel %vm698, %v682, 0
  %v862 = vsel %vm698, %v683, 0
  %v865 = vsel %vm698, %v684, 0
  %v868 = vsel %vm698, %v685, 0
  %v871 = vsel %vm698, %v686, 0
  %v874 = vsel %vm698, %v687, 0
  %v877 = vsel %vm698, %v688, 0
  %v880 = vsel %vm698, %v689, 0
  %v883 = vsel %vm698, %v690, 0
  %v886 = vsel %vm698, %v691, 0
  %v889 = vsel %vm698, %v692, 0
  %891 = vmatpush.msra.mxu0 0.0
  %892 = vmatpush.msra.mxu0 0.0
  %893 = vmatpush.msra.mxu0 0.0
  %894 = vmatpush.msra.mxu0 0.0
  %895 = vmatpush.msra.mxu0 0.0
  %896 = vmatpush.msra.mxu0 0.0
  %897 = vmatpush.msra.mxu0 0.0
  %898 = vmatpush.msra.mxu0 0.0
  %899 = vmatpush.msra.mxu0 0.0
  %900 = vmatpush.msra.mxu0 0.0
  %901 = vmatpush.msra.mxu0 0.0
  %902 = vmatpush.msra.mxu0 0.0
  %903 = vmatpush.msra.mxu0 0.0
  %904 = vmatpush.msra.mxu0 0.0
  %905 = vmatpush.msra.mxu0 0.0
  %906 = vmatpush.msra.mxu0 %v693
  %907 = vmatmul.f32.gmra.mxu0 %v700
  %v908 = vpop.f32.mrf.mxu0
  %v909 = vadd.f32 %v696, %v908
  %910 = vmatmul.f32.gmra.mxu0 %v703
  %v911 = vpop.f32.mrf.mxu0
  %v912 = vadd.f32 %v696, %v911
  %913 = vmatmul.f32.gmra.mxu0 %v706
  %v914 = vpop.f32.mrf.mxu0
  %v915 = vadd.f32 %v696, %v914
  %916 = vmatmul.f32.gmra.mxu0 %v709
  %v917 = vpop.f32.mrf.mxu0
  %v918 = vadd.f32 %v696, %v917
  %919 = vmatmul.f32.gmra.mxu0 %v712
  %v920 = vpop.f32.mrf.mxu0
  %v921 = vadd.f32 %v696, %v920
  %922 = vmatmul.f32.gmra.mxu0 %v715
  %v923 = vpop.f32.mrf.mxu0
  %v924 = vadd.f32 %v696, %v923
  %925 = vmatmul.f32.gmra.mxu0 %v718
  %v926 = vpop.f32.mrf.mxu0
  %v927 = vadd.f32 %v696, %v926
  %928 = vmatmul.f32.gmra.mxu0 %v721
  %v929 = vpop.f32.mrf.mxu0
  %v930 = vadd.f32 %v696, %v929
  %931 = vmatmul.f32.gmra.mxu0 %v724
  %v932 = vpop.f32.mrf.mxu0
  %v933 = vadd.f32 %v696, %v932
  %934 = vmatmul.f32.gmra.mxu0 %v727
  %v935 = vpop.f32.mrf.mxu0
  %v936 = vadd.f32 %v696, %v935
  %937 = vmatmul.f32.gmra.mxu0 %v730
  %v938 = vpop.f32.mrf.mxu0
  %v939 = vadd.f32 %v696, %v938
  %940 = vmatmul.f32.gmra.mxu0 %v733
  %v941 = vpop.f32.mrf.mxu0
  %v942 = vadd.f32 %v696, %v941
  %943 = vmatmul.f32.gmra.mxu0 %v736
  %v944 = vpop.f32.mrf.mxu0
  %v945 = vadd.f32 %v696, %v944
  %946 = vmatmul.f32.gmra.mxu0 %v739
  %v947 = vpop.f32.mrf.mxu0
  %v948 = vadd.f32 %v696, %v947
  %949 = vmatmul.f32.gmra.mxu0 %v742
  %v950 = vpop.f32.mrf.mxu0
  %v951 = vadd.f32 %v696, %v950
  %952 = vmatmul.f32.gmra.mxu0 %v745
  %v953 = vpop.f32.mrf.mxu0
  %v954 = vadd.f32 %v696, %v953
  %955 = vmatmul.f32.gmra.mxu0 %v748
  %v956 = vpop.f32.mrf.mxu0
  %v957 = vadd.f32 %v696, %v956
  %958 = vmatmul.f32.gmra.mxu0 %v751
  %v959 = vpop.f32.mrf.mxu0
  %v960 = vadd.f32 %v696, %v959
  %961 = vmatmul.f32.gmra.mxu0 %v754
  %v962 = vpop.f32.mrf.mxu0
  %v963 = vadd.f32 %v696, %v962
  %964 = vmatmul.f32.gmra.mxu0 %v757
  %v965 = vpop.f32.mrf.mxu0
  %v966 = vadd.f32 %v696, %v965
  %967 = vmatmul.f32.gmra.mxu0 %v760
  %v968 = vpop.f32.mrf.mxu0
  %v969 = vadd.f32 %v696, %v968
  %970 = vmatmul.f32.gmra.mxu0 %v763
  %v971 = vpop.f32.mrf.mxu0
  %v972 = vadd.f32 %v696, %v971
  %973 = vmatmul.f32.gmra.mxu0 %v766
  %v974 = vpop.f32.mrf.mxu0
  %v975 = vadd.f32 %v696, %v974
  %976 = vmatmul.f32.gmra.mxu0 %v769
  %v977 = vpop.f32.mrf.mxu0
  %v978 = vadd.f32 %v696, %v977
  %979 = vmatmul.f32.gmra.mxu0 %v772
  %v980 = vpop.f32.mrf.mxu0
  %v981 = vadd.f32 %v696, %v980
  %982 = vmatmul.f32.gmra.mxu0 %v775
  %v983 = vpop.f32.mrf.mxu0
  %v984 = vadd.f32 %v696, %v983
  %985 = vmatmul.f32.gmra.mxu0 %v778
  %v986 = vpop.f32.mrf.mxu0
  %v987 = vadd.f32 %v696, %v986
  %988 = vmatmul.f32.gmra.mxu0 %v781
  %v989 = vpop.f32.mrf.mxu0
  %v990 = vadd.f32 %v696, %v989
  %991 = vmatmul.f32.gmra.mxu0 %v784
  %v992 = vpop.f32.mrf.mxu0
  %v993 = vadd.f32 %v696, %v992
  %994 = vmatmul.f32.gmra.mxu0 %v787
  %v995 = vpop.f32.mrf.mxu0
  %v996 = vadd.f32 %v696, %v995
  %997 = vmatmul.f32.gmra.mxu0 %v790
  %v998 = vpop.f32.mrf.mxu0
  %v999 = vadd.f32 %v696, %v998
  %1000 = vmatmul.f32.gmra.mxu0 %v793
  %v1001 = vpop.f32.mrf.mxu0
  %v1002 = vadd.f32 %v696, %v1001
  %1003 = vmatmul.f32.gmra.mxu0 %v796
  %v1004 = vpop.f32.mrf.mxu0
  %v1005 = vadd.f32 %v696, %v1004
  %1006 = vmatmul.f32.gmra.mxu0 %v799
  %v1007 = vpop.f32.mrf.mxu0
  %v1008 = vadd.f32 %v696, %v1007
  %1009 = vmatmul.f32.gmra.mxu0 %v802
  %v1010 = vpop.f32.mrf.mxu0
  %v1011 = vadd.f32 %v696, %v1010
  %1012 = vmatmul.f32.gmra.mxu0 %v805
  %v1013 = vpop.f32.mrf.mxu0
  %v1014 = vadd.f32 %v696, %v1013
  %1015 = vmatmul.f32.gmra.mxu0 %v808
  %v1016 = vpop.f32.mrf.mxu0
  %v1017 = vadd.f32 %v696, %v1016
  %1018 = vmatmul.f32.gmra.mxu0 %v811
  %v1019 = vpop.f32.mrf.mxu0
  %v1020 = vadd.f32 %v696, %v1019
  %1021 = vmatmul.f32.gmra.mxu0 %v814
  %v1022 = vpop.f32.mrf.mxu0
  %v1023 = vadd.f32 %v696, %v1022
  %1024 = vmatmul.f32.gmra.mxu0 %v817
  %v1025 = vpop.f32.mrf.mxu0
  %v1026 = vadd.f32 %v696, %v1025
  %1027 = vmatmul.f32.gmra.mxu0 %v820
  %v1028 = vpop.f32.mrf.mxu0
  %v1029 = vadd.f32 %v696, %v1028
  %1030 = vmatmul.f32.gmra.mxu0 %v823
  %v1031 = vpop.f32.mrf.mxu0
  %v1032 = vadd.f32 %v696, %v1031
  %1033 = vmatmul.f32.gmra.mxu0 %v826
  %v1034 = vpop.f32.mrf.mxu0
  %v1035 = vadd.f32 %v696, %v1034
  %1036 = vmatmul.f32.gmra.mxu0 %v829
  %v1037 = vpop.f32.mrf.mxu0
  %v1038 = vadd.f32 %v696, %v1037
  %1039 = vmatmul.f32.gmra.mxu0 %v832
  %v1040 = vpop.f32.mrf.mxu0
  %v1041 = vadd.f32 %v696, %v1040
  %1042 = vmatmul.f32.gmra.mxu0 %v835
  %v1043 = vpop.f32.mrf.mxu0
  %v1044 = vadd.f32 %v696, %v1043
  %1045 = vmatmul.f32.gmra.mxu0 %v838
  %v1046 = vpop.f32.mrf.mxu0
  %v1047 = vadd.f32 %v696, %v1046
  %1048 = vmatmul.f32.gmra.mxu0 %v841
  %v1049 = vpop.f32.mrf.mxu0
  %v1050 = vadd.f32 %v696, %v1049
  %1051 = vmatmul.f32.gmra.mxu0 %v844
  %v1052 = vpop.f32.mrf.mxu0
  %v1053 = vadd.f32 %v696, %v1052
  %1054 = vmatmul.f32.gmra.mxu0 %v847
  %v1055 = vpop.f32.mrf.mxu0
  %v1056 = vadd.f32 %v696, %v1055
  %1057 = vmatmul.f32.gmra.mxu0 %v850
  %v1058 = vpop.f32.mrf.mxu0
  %v1059 = vadd.f32 %v696, %v1058
  %1060 = vmatmul.f32.gmra.mxu0 %v853
  %v1061 = vpop.f32.mrf.mxu0
  %v1062 = vadd.f32 %v696, %v1061
  %1063 = vmatmul.f32.gmra.mxu0 %v856
  %v1064 = vpop.f32.mrf.mxu0
  %v1065 = vadd.f32 %v696, %v1064
  %1066 = vmatmul.f32.gmra.mxu0 %v859
  %v1067 = vpop.f32.mrf.mxu0
  %v1068 = vadd.f32 %v696, %v1067
  %1069 = vmatmul.f32.gmra.mxu0 %v862
  %v1070 = vpop.f32.mrf.mxu0
  %v1071 = vadd.f32 %v696, %v1070
  %1072 = vmatmul.f32.gmra.mxu0 %v865
  %v1073 = vpop.f32.mrf.mxu0
  %v1074 = vadd.f32 %v696, %v1073
  %1075 = vmatmul.f32.gmra.mxu0 %v868
  %v1076 = vpop.f32.mrf.mxu0
  %v1077 = vadd.f32 %v696, %v1076
  %1078 = vmatmul.f32.gmra.mxu0 %v871
  %v1079 = vpop.f32.mrf.mxu0
  %v1080 = vadd.f32 %v696, %v1079
  %1081 = vmatmul.f32.gmra.mxu0 %v874
  %v1082 = vpop.f32.mrf.mxu0
  %v1083 = vadd.f32 %v696, %v1082
  %1084 = vmatmul.f32.gmra.mxu0 %v877
  %v1085 = vpop.f32.mrf.mxu0
  %v1086 = vadd.f32 %v696, %v1085
  %1087 = vmatmul.f32.gmra.mxu0 %v880
  %v1088 = vpop.f32.mrf.mxu0
  %v1089 = vadd.f32 %v696, %v1088
  %1090 = vmatmul.f32.gmra.mxu0 %v883
  %v1091 = vpop.f32.mrf.mxu0
  %v1092 = vadd.f32 %v696, %v1091
  %1093 = vmatmul.f32.gmra.mxu0 %v886
  %v1094 = vpop.f32.mrf.mxu0
  %v1095 = vadd.f32 %v696, %v1094
  %1096 = vmatmul.f32.gmra.mxu0 %v889
  %v1097 = vpop.f32.mrf.mxu0
  %v1098 = vadd.f32 %v696, %v1097
  %1099 = vdwg.mxu0
  %v1100 = vmax.f32 %v909, 0.0
  %v1101 = vmax.f32 %v912, 0.0
  %v1102 = vmax.f32 %v915, 0.0
  %v1103 = vmax.f32 %v918, 0.0
  %v1104 = vmax.f32 %v921, 0.0
  %v1105 = vmax.f32 %v924, 0.0
  %v1106 = vmax.f32 %v927, 0.0
  %v1107 = vmax.f32 %v930, 0.0
  %v1108 = vmax.f32 %v933, 0.0
  %v1109 = vmax.f32 %v936, 0.0
  %v1110 = vmax.f32 %v939, 0.0
  %v1111 = vmax.f32 %v942, 0.0
  %v1112 = vmax.f32 %v945, 0.0
  %v1113 = vmax.f32 %v948, 0.0
  %v1114 = vmax.f32 %v951, 0.0
  %v1115 = vmax.f32 %v954, 0.0
  %v1116 = vmax.f32 %v957, 0.0
  %v1117 = vmax.f32 %v960, 0.0
  %v1118 = vmax.f32 %v963, 0.0
  %v1119 = vmax.f32 %v966, 0.0
  %v1120 = vmax.f32 %v969, 0.0
  %v1121 = vmax.f32 %v972, 0.0
  %v1122 = vmax.f32 %v975, 0.0
  %v1123 = vmax.f32 %v978, 0.0
  %v1124 = vmax.f32 %v981, 0.0
  %v1125 = vmax.f32 %v984, 0.0
  %v1126 = vmax.f32 %v987, 0.0
  %v1127 = vmax.f32 %v990, 0.0
  %v1128 = vmax.f32 %v993, 0.0
  %v1129 = vmax.f32 %v996, 0.0
  %v1130 = vmax.f32 %v999, 0.0
  %v1131 = vmax.f32 %v1002, 0.0
  %v1132 = vmax.f32 %v1005, 0.0
  %v1133 = vmax.f32 %v1008, 0.0
  %v1134 = vmax.f32 %v1011, 0.0
  %v1135 = vmax.f32 %v1014, 0.0
  %v1136 = vmax.f32 %v1017, 0.0
  %v1137 = vmax.f32 %v1020, 0.0
  %v1138 = vmax.f32 %v1023, 0.0
  %v1139 = vmax.f32 %v1026, 0.0
  %v1140 = vmax.f32 %v1029, 0.0
  %v1141 = vmax.f32 %v1032, 0.0
  %v1142 = vmax.f32 %v1035, 0.0
  %v1143 = vmax.f32 %v1038, 0.0
  %v1144 = vmax.f32 %v1041, 0.0
  %v1145 = vmax.f32 %v1044, 0.0
  %v1146 = vmax.f32 %v1047, 0.0
  %v1147 = vmax.f32 %v1050, 0.0
  %v1148 = vmax.f32 %v1053, 0.0
  %v1149 = vmax.f32 %v1056, 0.0
  %v1150 = vmax.f32 %v1059, 0.0
  %v1151 = vmax.f32 %v1062, 0.0
  %v1152 = vmax.f32 %v1065, 0.0
  %v1153 = vmax.f32 %v1068, 0.0
  %v1154 = vmax.f32 %v1071, 0.0
  %v1155 = vmax.f32 %v1074, 0.0
  %v1156 = vmax.f32 %v1077, 0.0
  %v1157 = vmax.f32 %v1080, 0.0
  %v1158 = vmax.f32 %v1083, 0.0
  %v1159 = vmax.f32 %v1086, 0.0
  %v1160 = vmax.f32 %v1089, 0.0
  %v1161 = vmax.f32 %v1092, 0.0
  %v1162 = vmax.f32 %v1095, 0.0
  %v1163 = vmax.f32 %v1098, 0.0
  %v1164 = vld [vmem:[%s5] sm:$0xff]
  %v1165 = vld [vmem:[%s6] sm:$0x1]
  %v1167 = vperm.slane %v1165, 0
  %v1170 = vsel %vm698, %v1100, 0
  %v1173 = vsel %vm698, %v1101, 0
  %v1176 = vsel %vm698, %v1102, 0
  %v1179 = vsel %vm698, %v1103, 0
  %v1182 = vsel %vm698, %v1104, 0
  %v1185 = vsel %vm698, %v1105, 0
  %v1188 = vsel %vm698, %v1106, 0
  %v1191 = vsel %vm698, %v1107, 0
  %v1194 = vsel %vm698, %v1108, 0
  %v1197 = vsel %vm698, %v1109, 0
  %v1200 = vsel %vm698, %v1110, 0
  %v1203 = vsel %vm698, %v1111, 0
  %v1206 = vsel %vm698, %v1112, 0
  %v1209 = vsel %vm698, %v1113, 0
  %v1212 = vsel %vm698, %v1114, 0
  %v1215 = vsel %vm698, %v1115, 0
  %v1218 = vsel %vm698, %v1116, 0
  %v1221 = vsel %vm698, %v1117, 0
  %v1224 = vsel %vm698, %v1118, 0
  %v1227 = vsel %vm698, %v1119, 0
  %v1230 = vsel %vm698, %v1120, 0
  %v1233 = vsel %vm698, %v1121, 0
  %v1236 = vsel %vm698, %v1122, 0
  %v1239 = vsel %vm698, %v1123, 0
  %v1242 = vsel %vm698, %v1124, 0
  %v1245 = vsel %vm698, %v1125, 0
  %v1248 = vsel %vm698, %v1126, 0
  %v1251 = vsel %vm698, %v1127, 0
  %v1254 = vsel %vm698, %v1128, 0
  %v1257 = vsel %vm698, %v1129, 0
  %v1260 = vsel %vm698, %v1130, 0
  %v1263 = vsel %vm698, %v1131, 0
  %v1266 = vsel %vm698, %v1132, 0
  %v1269 = vsel %vm698, %v1133, 0
  %v1272 = vsel %vm698, %v1134, 0
  %v1275 = vsel %vm698, %v1135, 0
  %v1278 = vsel %vm698, %v1136, 0
  %v1281 = vsel %vm698, %v1137, 0
  %v1284 = vsel %vm698, %v1138, 0
  %v1287 = vsel %vm698, %v1139, 0
  %v1290 = vsel %vm698, %v1140, 0
  %v1293 = vsel %vm698, %v1141, 0
  %v1296 = vsel %vm698, %v1142, 0
  %v1299 = vsel %vm698, %v1143, 0
  %v1302 = vsel %vm698, %v1144, 0
  %v1305 = vsel %vm698, %v1145, 0
  %v1308 = vsel %vm698, %v1146, 0
  %v1311 = vsel %vm698, %v1147, 0
  %v1314 = vsel %vm698, %v1148, 0
  %v1317 = vsel %vm698, %v1149, 0
  %v1320 = vsel %vm698, %v1150, 0
  %v1323 = vsel %vm698, %v1151, 0
  %v1326 = vsel %vm698, %v1152, 0
  %v1329 = vsel %vm698, %v1153, 0
  %v1332 = vsel %vm698, %v1154, 0
  %v1335 = vsel %vm698, %v1155, 0
  %v1338 = vsel %vm698, %v1156, 0
  %v1341 = vsel %vm698, %v1157, 0
  %v1344 = vsel %vm698, %v1158, 0
  %v1347 = vsel %vm698, %v1159, 0
  %v1350 = vsel %vm698, %v1160, 0
  %v1353 = vsel %vm698, %v1161, 0
  %v1356 = vsel %vm698, %v1162, 0
  %v1359 = vsel %vm698, %v1163, 0
  %1361 = vmatpush.msra.mxu0 0.0
  %1362 = vmatpush.msra.mxu0 0.0
  %1363 = vmatpush.msra.mxu0 0.0
  %1364 = vmatpush.msra.mxu0 0.0
  %1365 = vmatpush.msra.mxu0 0.0
  %1366 = vmatpush.msra.mxu0 0.0
  %1367 = vmatpush.msra.mxu0 0.0
  %1368 = vmatpush.msra.mxu0 0.0
  %1369 = vmatpush.msra.mxu0 0.0
  %1370 = vmatpush.msra.mxu0 0.0
  %1371 = vmatpush.msra.mxu0 0.0
  %1372 = vmatpush.msra.mxu0 0.0
  %1373 = vmatpush.msra.mxu0 0.0
  %1374 = vmatpush.msra.mxu0 0.0
  %1375 = vmatpush.msra.mxu0 0.0
  %1376 = vmatpush.msra.mxu0 %v1164
  %1377 = vmatmul.f32.gmra.mxu0 %v1170
  %v1378 = vpop.f32.mrf.mxu0
  %v1379 = vadd.f32 %v1167, %v1378
  %1380 = vmatmul.f32.gmra.mxu0 %v1173
  %v1381 = vpop.f32.mrf.mxu0
  %v1382 = vadd.f32 %v1167, %v1381
  %1383 = vmatmul.f32.gmra.mxu0 %v1176
  %v1384 = vpop.f32.mrf.mxu0
  %v1385 = vadd.f32 %v1167, %v1384
  %1386 = vmatmul.f32.gmra.mxu0 %v1179
  %v1387 = vpop.f32.mrf.mxu0
  %v1388 = vadd.f32 %v1167, %v1387
  %1389 = vmatmul.f32.gmra.mxu0 %v1182
  %v1390 = vpop.f32.mrf.mxu0
  %v1391 = vadd.f32 %v1167, %v1390
  %1392 = vmatmul.f32.gmra.mxu0 %v1185
  %v1393 = vpop.f32.mrf.mxu0
  %v1394 = vadd.f32 %v1167, %v1393
  %1395 = vmatmul.f32.gmra.mxu0 %v1188
  %v1396 = vpop.f32.mrf.mxu0
  %v1397 = vadd.f32 %v1167, %v1396
  %1398 = vmatmul.f32.gmra.mxu0 %v1191
  %v1399 = vpop.f32.mrf.mxu0
  %v1400 = vadd.f32 %v1167, %v1399
  %1401 = vmatmul.f32.gmra.mxu0 %v1194
  %v1402 = vpop.f32.mrf.mxu0
  %v1403 = vadd.f32 %v1167, %v1402
  %1404 = vmatmul.f32.gmra.mxu0 %v1197
  %v1405 = vpop.f32.mrf.mxu0
  %v1406 = vadd.f32 %v1167, %v1405
  %1407 = vmatmul.f32.gmra.mxu0 %v1200
  %v1408 = vpop.f32.mrf.mxu0
  %v1409 = vadd.f32 %v1167, %v1408
  %1410 = vmatmul.f32.gmra.mxu0 %v1203
  %v1411 = vpop.f32.mrf.mxu0
  %v1412 = vadd.f32 %v1167, %v1411
  %1413 = vmatmul.f32.gmra.mxu0 %v1206
  %v1414 = vpop.f32.mrf.mxu0
  %v1415 = vadd.f32 %v1167, %v1414
  %1416 = vmatmul.f32.gmra.mxu0 %v1209
  %v1417 = vpop.f32.mrf.mxu0
  %v1418 = vadd.f32 %v1167, %v1417
  %1419 = vmatmul.f32.gmra.mxu0 %v1212
  %v1420 = vpop.f32.mrf.mxu0
  %v1421 = vadd.f32 %v1167, %v1420
  %1422 = vmatmul.f32.gmra.mxu0 %v1215
  %v1423 = vpop.f32.mrf.mxu0
  %v1424 = vadd.f32 %v1167, %v1423
  %1425 = vmatmul.f32.gmra.mxu0 %v1218
  %v1426 = vpop.f32.mrf.mxu0
  %v1427 = vadd.f32 %v1167, %v1426
  %1428 = vmatmul.f32.gmra.mxu0 %v1221
  %v1429 = vpop.f32.mrf.mxu0
  %v1430 = vadd.f32 %v1167, %v1429
  %1431 = vmatmul.f32.gmra.mxu0 %v1224
  %v1432 = vpop.f32.mrf.mxu0
  %v1433 = vadd.f32 %v1167, %v1432
  %1434 = vmatmul.f32.gmra.mxu0 %v1227
  %v1435 = vpop.f32.mrf.mxu0
  %v1436 = vadd.f32 %v1167, %v1435
  %1437 = vmatmul.f32.gmra.mxu0 %v1230
  %v1438 = vpop.f32.mrf.mxu0
  %v1439 = vadd.f32 %v1167, %v1438
  %1440 = vmatmul.f32.gmra.mxu0 %v1233
  %v1441 = vpop.f32.mrf.mxu0
  %v1442 = vadd.f32 %v1167, %v1441
  %1443 = vmatmul.f32.gmra.mxu0 %v1236
  %v1444 = vpop.f32.mrf.mxu0
  %v1445 = vadd.f32 %v1167, %v1444
  %1446 = vmatmul.f32.gmra.mxu0 %v1239
  %v1447 = vpop.f32.mrf.mxu0
  %v1448 = vadd.f32 %v1167, %v1447
  %1449 = vmatmul.f32.gmra.mxu0 %v1242
  %v1450 = vpop.f32.mrf.mxu0
  %v1451 = vadd.f32 %v1167, %v1450
  %1452 = vmatmul.f32.gmra.mxu0 %v1245
  %v1453 = vpop.f32.mrf.mxu0
  %v1454 = vadd.f32 %v1167, %v1453
  %1455 = vmatmul.f32.gmra.mxu0 %v1248
  %v1456 = vpop.f32.mrf.mxu0
  %v1457 = vadd.f32 %v1167, %v1456
  %1458 = vmatmul.f32.gmra.mxu0 %v1251
  %v1459 = vpop.f32.mrf.mxu0
  %v1460 = vadd.f32 %v1167, %v1459
  %1461 = vmatmul.f32.gmra.mxu0 %v1254
  %v1462 = vpop.f32.mrf.mxu0
  %v1463 = vadd.f32 %v1167, %v1462
  %1464 = vmatmul.f32.gmra.mxu0 %v1257
  %v1465 = vpop.f32.mrf.mxu0
  %v1466 = vadd.f32 %v1167, %v1465
  %1467 = vmatmul.f32.gmra.mxu0 %v1260
  %v1468 = vpop.f32.mrf.mxu0
  %v1469 = vadd.f32 %v1167, %v1468
  %1470 = vmatmul.f32.gmra.mxu0 %v1263
  %v1471 = vpop.f32.mrf.mxu0
  %v1472 = vadd.f32 %v1167, %v1471
  %1473 = vmatmul.f32.gmra.mxu0 %v1266
  %v1474 = vpop.f32.mrf.mxu0
  %v1475 = vadd.f32 %v1167, %v1474
  %1476 = vmatmul.f32.gmra.mxu0 %v1269
  %v1477 = vpop.f32.mrf.mxu0
  %v1478 = vadd.f32 %v1167, %v1477
  %1479 = vmatmul.f32.gmra.mxu0 %v1272
  %v1480 = vpop.f32.mrf.mxu0
  %v1481 = vadd.f32 %v1167, %v1480
  %1482 = vmatmul.f32.gmra.mxu0 %v1275
  %v1483 = vpop.f32.mrf.mxu0
  %v1484 = vadd.f32 %v1167, %v1483
  %1485 = vmatmul.f32.gmra.mxu0 %v1278
  %v1486 = vpop.f32.mrf.mxu0
  %v1487 = vadd.f32 %v1167, %v1486
  %1488 = vmatmul.f32.gmra.mxu0 %v1281
  %v1489 = vpop.f32.mrf.mxu0
  %v1490 = vadd.f32 %v1167, %v1489
  %1491 = vmatmul.f32.gmra.mxu0 %v1284
  %v1492 = vpop.f32.mrf.mxu0
  %v1493 = vadd.f32 %v1167, %v1492
  %1494 = vmatmul.f32.gmra.mxu0 %v1287
  %v1495 = vpop.f32.mrf.mxu0
  %v1496 = vadd.f32 %v1167, %v1495
  %1497 = vmatmul.f32.gmra.mxu0 %v1290
  %v1498 = vpop.f32.mrf.mxu0
  %v1499 = vadd.f32 %v1167, %v1498
  %1500 = vmatmul.f32.gmra.mxu0 %v1293
  %v1501 = vpop.f32.mrf.mxu0
  %v1502 = vadd.f32 %v1167, %v1501
  %1503 = vmatmul.f32.gmra.mxu0 %v1296
  %v1504 = vpop.f32.mrf.mxu0
  %v1505 = vadd.f32 %v1167, %v1504
  %1506 = vmatmul.f32.gmra.mxu0 %v1299
  %v1507 = vpop.f32.mrf.mxu0
  %v1508 = vadd.f32 %v1167, %v1507
  %1509 = vmatmul.f32.gmra.mxu0 %v1302
  %v1510 = vpop.f32.mrf.mxu0
  %v1511 = vadd.f32 %v1167, %v1510
  %1512 = vmatmul.f32.gmra.mxu0 %v1305
  %v1513 = vpop.f32.mrf.mxu0
  %v1514 = vadd.f32 %v1167, %v1513
  %1515 = vmatmul.f32.gmra.mxu0 %v1308
  %v1516 = vpop.f32.mrf.mxu0
  %v1517 = vadd.f32 %v1167, %v1516
  %1518 = vmatmul.f32.gmra.mxu0 %v1311
  %v1519 = vpop.f32.mrf.mxu0
  %v1520 = vadd.f32 %v1167, %v1519
  %1521 = vmatmul.f32.gmra.mxu0 %v1314
  %v1522 = vpop.f32.mrf.mxu0
  %v1523 = vadd.f32 %v1167, %v1522
  %1524 = vmatmul.f32.gmra.mxu0 %v1317
  %v1525 = vpop.f32.mrf.mxu0
  %v1526 = vadd.f32 %v1167, %v1525
  %1527 = vmatmul.f32.gmra.mxu0 %v1320
  %v1528 = vpop.f32.mrf.mxu0
  %v1529 = vadd.f32 %v1167, %v1528
  %1530 = vmatmul.f32.gmra.mxu0 %v1323
  %v1531 = vpop.f32.mrf.mxu0
  %v1532 = vadd.f32 %v1167, %v1531
  %1533 = vmatmul.f32.gmra.mxu0 %v1326
  %v1534 = vpop.f32.mrf.mxu0
  %v1535 = vadd.f32 %v1167, %v1534
  %1536 = vmatmul.f32.gmra.mxu0 %v1329
  %v1537 = vpop.f32.mrf.mxu0
  %v1538 = vadd.f32 %v1167, %v1537
  %1539 = vmatmul.f32.gmra.mxu0 %v1332
  %v1540 = vpop.f32.mrf.mxu0
  %v1541 = vadd.f32 %v1167, %v1540
  %1542 = vmatmul.f32.gmra.mxu0 %v1335
  %v1543 = vpop.f32.mrf.mxu0
  %v1544 = vadd.f32 %v1167, %v1543
  %1545 = vmatmul.f32.gmra.mxu0 %v1338
  %v1546 = vpop.f32.mrf.mxu0
  %v1547 = vadd.f32 %v1167, %v1546
  %1548 = vmatmul.f32.gmra.mxu0 %v1341
  %v1549 = vpop.f32.mrf.mxu0
  %v1550 = vadd.f32 %v1167, %v1549
  %1551 = vmatmul.f32.gmra.mxu0 %v1344
  %v1552 = vpop.f32.mrf.mxu0
  %v1553 = vadd.f32 %v1167, %v1552
  %1554 = vmatmul.f32.gmra.mxu0 %v1347
  %v1555 = vpop.f32.mrf.mxu0
  %v1556 = vadd.f32 %v1167, %v1555
  %1557 = vmatmul.f32.gmra.mxu0 %v1350
  %v1558 = vpop.f32.mrf.mxu0
  %v1559 = vadd.f32 %v1167, %v1558
  %1560 = vmatmul.f32.gmra.mxu0 %v1353
  %v1561 = vpop.f32.mrf.mxu0
  %v1562 = vadd.f32 %v1167, %v1561
  %1563 = vmatmul.f32.gmra.mxu0 %v1356
  %v1564 = vpop.f32.mrf.mxu0
  %v1565 = vadd.f32 %v1167, %v1564
  %1566 = vmatmul.f32.gmra.mxu0 %v1359
  %v1567 = vpop.f32.mrf.mxu0
  %v1568 = vadd.f32 %v1167, %v1567
  %1569 = vdwg.mxu0
  %v1570 = vmax.f32 %v1379, 0.0
  %v1571 = vmax.f32 %v1382, 0.0
  %v1572 = vmax.f32 %v1385, 0.0
  %v1573 = vmax.f32 %v1388, 0.0
  %v1574 = vmax.f32 %v1391, 0.0
  %v1575 = vmax.f32 %v1394, 0.0
  %v1576 = vmax.f32 %v1397, 0.0
  %v1577 = vmax.f32 %v1400, 0.0
  %v1578 = vmax.f32 %v1403, 0.0
  %v1579 = vmax.f32 %v1406, 0.0
  %v1580 = vmax.f32 %v1409, 0.0
  %v1581 = vmax.f32 %v1412, 0.0
  %v1582 = vmax.f32 %v1415, 0.0
  %v1583 = vmax.f32 %v1418, 0.0
  %v1584 = vmax.f32 %v1421, 0.0
  %v1585 = vmax.f32 %v1424, 0.0
  %v1586 = vmax.f32 %v1427, 0.0
  %v1587 = vmax.f32 %v1430, 0.0
  %v1588 = vmax.f32 %v1433, 0.0
  %v1589 = vmax.f32 %v1436, 0.0
  %v1590 = vmax.f32 %v1439, 0.0
  %v1591 = vmax.f32 %v1442, 0.0
  %v1592 = vmax.f32 %v1445, 0.0
  %v1593 = vmax.f32 %v1448, 0.0
  %v1594 = vmax.f32 %v1451, 0.0
  %v1595 = vmax.f32 %v1454, 0.0
  %v1596 = vmax.f32 %v1457, 0.0
  %v1597 = vmax.f32 %v1460, 0.0
  %v1598 = vmax.f32 %v1463, 0.0
  %v1599 = vmax.f32 %v1466, 0.0
  %v1600 = vmax.f32 %v1469, 0.0
  %v1601 = vmax.f32 %v1472, 0.0
  %v1602 = vmax.f32 %v1475, 0.0
  %v1603 = vmax.f32 %v1478, 0.0
  %v1604 = vmax.f32 %v1481, 0.0
  %v1605 = vmax.f32 %v1484, 0.0
  %v1606 = vmax.f32 %v1487, 0.0
  %v1607 = vmax.f32 %v1490, 0.0
  %v1608 = vmax.f32 %v1493, 0.0
  %v1609 = vmax.f32 %v1496, 0.0
  %v1610 = vmax.f32 %v1499, 0.0
  %v1611 = vmax.f32 %v1502, 0.0
  %v1612 = vmax.f32 %v1505, 0.0
  %v1613 = vmax.f32 %v1508, 0.0
  %v1614 = vmax.f32 %v1511, 0.0
  %v1615 = vmax.f32 %v1514, 0.0
  %v1616 = vmax.f32 %v1517, 0.0
  %v1617 = vmax.f32 %v1520, 0.0
  %v1618 = vmax.f32 %v1523, 0.0
  %v1619 = vmax.f32 %v1526, 0.0
  %v1620 = vmax.f32 %v1529, 0.0
  %v1621 = vmax.f32 %v1532, 0.0
  %v1622 = vmax.f32 %v1535, 0.0
  %v1623 = vmax.f32 %v1538, 0.0
  %v1624 = vmax.f32 %v1541, 0.0
  %v1625 = vmax.f32 %v1544, 0.0
  %v1626 = vmax.f32 %v1547, 0.0
  %v1627 = vmax.f32 %v1550, 0.0
  %v1628 = vmax.f32 %v1553, 0.0
  %v1629 = vmax.f32 %v1556, 0.0
  %v1630 = vmax.f32 %v1559, 0.0
  %v1631 = vmax.f32 %v1562, 0.0
  %v1632 = vmax.f32 %v1565, 0.0
  %v1633 = vmax.f32 %v1568, 0.0
  %1634 = vst.msk [vmem:[%s7] sm:$0xff] %vm698, %v1570
  %1635 = vst.msk [vmem:[%s7 + $0x8] sm:$0xff] %vm698, %v1571
  %1636 = vst.msk [vmem:[%s7 + $0x10] sm:$0xff] %vm698, %v1572
  %1637 = vst.msk [vmem:[%s7 + $0x18] sm:$0xff] %vm698, %v1573
  %1638 = vst.msk [vmem:[%s7 + $0x20] sm:$0xff] %vm698, %v1574
  %1639 = vst.msk [vmem:[%s7 + $0x28] sm:$0xff] %vm698, %v1575
  %1640 = vst.msk [vmem:[%s7 + $0x30] sm:$0xff] %vm698, %v1576
  %1641 = vst.msk [vmem:[%s7 + $0x38] sm:$0xff] %vm698, %v1577
  %1642 = vst.msk [vmem:[%s7 + $0x40] sm:$0xff] %vm698, %v1578
  %1643 = vst.msk [vmem:[%s7 + $0x48] sm:$0xff] %vm698, %v1579
  %1644 = vst.msk [vmem:[%s7 + $0x50] sm:$0xff] %vm698, %v1580
  %1645 = vst.msk [vmem:[%s7 + $0x58] sm:$0xff] %vm698, %v1581
  %1646 = vst.msk [vmem:[%s7 + $0x60] sm:$0xff] %vm698, %v1582
  %1647 = vst.msk [vmem:[%s7 + $0x68] sm:$0xff] %vm698, %v1583
  %1648 = vst.msk [vmem:[%s7 + $0x70] sm:$0xff] %vm698, %v1584
  %1649 = vst.msk [vmem:[%s7 + $0x78] sm:$0xff] %vm698, %v1585
  %1650 = vst.msk [vmem:[%s7 + $0x80] sm:$0xff] %vm698, %v1586
  %1651 = vst.msk [vmem:[%s7 + $0x88] sm:$0xff] %vm698, %v1587
  %1652 = vst.msk [vmem:[%s7 + $0x90] sm:$0xff] %vm698, %v1588
  %1653 = vst.msk [vmem:[%s7 + $0x98] sm:$0xff] %vm698, %v1589
  %1654 = vst.msk [vmem:[%s7 + $0xa0] sm:$0xff] %vm698, %v1590
  %1655 = vst.msk [vmem:[%s7 + $0xa8] sm:$0xff] %vm698, %v1591
  %1656 = vst.msk [vmem:[%s7 + $0xb0] sm:$0xff] %vm698, %v1592
  %1657 = vst.msk [vmem:[%s7 + $0xb8] sm:$0xff] %vm698, %v1593
  %1658 = vst.msk [vmem:[%s7 + $0xc0] sm:$0xff] %vm698, %v1594
  %1659 = vst.msk [vmem:[%s7 + $0xc8] sm:$0xff] %vm698, %v1595
  %1660 = vst.msk [vmem:[%s7 + $0xd0] sm:$0xff] %vm698, %v1596
  %1661 = vst.msk [vmem:[%s7 + $0xd8] sm:$0xff] %vm698, %v1597
  %1662 = vst.msk [vmem:[%s7 + $0xe0] sm:$0xff] %vm698, %v1598
  %1663 = vst.msk [vmem:[%s7 + $0xe8] sm:$0xff] %vm698, %v1599
  %1664 = vst.msk [vmem:[%s7 + $0xf0] sm:$0xff] %vm698, %v1600
  %1665 = vst.msk [vmem:[%s7 + $0xf8] sm:$0xff] %vm698, %v1601
  %1666 = vst.msk [vmem:[%s7 + $0x100] sm:$0xff] %vm698, %v1602
  %1667 = vst.msk [vmem:[%s7 + $0x108] sm:$0xff] %vm698, %v1603
  %1668 = vst.msk [vmem:[%s7 + $0x110] sm:$0xff] %vm698, %v1604
  %1669 = vst.msk [vmem:[%s7 + $0x118] sm:$0xff] %vm698, %v1605
  %1670 = vst.msk [vmem:[%s7 + $0x120] sm:$0xff] %vm698, %v1606
  %1671 = vst.msk [vmem:[%s7 + $0x128] sm:$0xff] %vm698, %v1607
  %1672 = vst.msk [vmem:[%s7 + $0x130] sm:$0xff] %vm698, %v1608
  %1673 = vst.msk [vmem:[%s7 + $0x138] sm:$0xff] %vm698, %v1609
  %1674 = vst.msk [vmem:[%s7 + $0x140] sm:$0xff] %vm698, %v1610
  %1675 = vst.msk [vmem:[%s7 + $0x148] sm:$0xff] %vm698, %v1611
  %1676 = vst.msk [vmem:[%s7 + $0x150] sm:$0xff] %vm698, %v1612
  %1677 = vst.msk [vmem:[%s7 + $0x158] sm:$0xff] %vm698, %v1613
  %1678 = vst.msk [vmem:[%s7 + $0x160] sm:$0xff] %vm698, %v1614
  %1679 = vst.msk [vmem:[%s7 + $0x168] sm:$0xff] %vm698, %v1615
  %1680 = vst.msk [vmem:[%s7 + $0x170] sm:$0xff] %vm698, %v1616
  %1681 = vst.msk [vmem:[%s7 + $0x178] sm:$0xff] %vm698, %v1617
  %1682 = vst.msk [vmem:[%s7 + $0x180] sm:$0xff] %vm698, %v1618
  %1683 = vst.msk [vmem:[%s7 + $0x188] sm:$0xff] %vm698, %v1619
  %1684 = vst.msk [vmem:[%s7 + $0x190] sm:$0xff] %vm698, %v1620
  %1685 = vst.msk [vmem:[%s7 + $0x198] sm:$0xff] %vm698, %v1621
  %1686 = vst.msk [vmem:[%s7 + $0x1a0] sm:$0xff] %vm698, %v1622
  %1687 = vst.msk [vmem:[%s7 + $0x1a8] sm:$0xff] %vm698, %v1623
  %1688 = vst.msk [vmem:[%s7 + $0x1b0] sm:$0xff] %vm698, %v1624
  %1689 = vst.msk [vmem:[%s7 + $0x1b8] sm:$0xff] %vm698, %v1625
  %1690 = vst.msk [vmem:[%s7 + $0x1c0] sm:$0xff] %vm698, %v1626
  %1691 = vst.msk [vmem:[%s7 + $0x1c8] sm:$0xff] %vm698, %v1627
  %1692 = vst.msk [vmem:[%s7 + $0x1d0] sm:$0xff] %vm698, %v1628
  %1693 = vst.msk [vmem:[%s7 + $0x1d8] sm:$0xff] %vm698, %v1629
  %1694 = vst.msk [vmem:[%s7 + $0x1e0] sm:$0xff] %vm698, %v1630
  %1695 = vst.msk [vmem:[%s7 + $0x1e8] sm:$0xff] %vm698, %v1631
  %1696 = vst.msk [vmem:[%s7 + $0x1f0] sm:$0xff] %vm698, %v1632
  %1697 = vst.msk [vmem:[%s7 + $0x1f8] sm:$0xff] %vm698, %v1633
  // Predicated region
  $region30: #{one_encoder_forward.3} parent=0 // pred_check
    _
  $region31: #{one_encoder_forward.3} parent=0 // pred_check_branch
    %1699 = sbr.rel (0) target = $region33
  $region32: #{one_encoder_forward.3} parent=0 // pred_region
    _
  $region33: #{one_encoder_forward.3} parent=0 // pred_fallthru
    _
  // Predicated region
  $region34: #{one_encoder_forward.3} parent=0 // pred_check
    _
  $region35: #{one_encoder_forward.3} parent=0 // pred_check_branch
    %1701 = sbr.rel (0) target = $region37
  $region36: #{one_encoder_forward.3} parent=0 // pred_region
    _
  $region37: #{one_encoder_forward.3} parent=0 // pred_fallthru
    _

// kernel: one_encoder_forward.5
$region0: #{one_encoder_forward.5}
  #allocation0 [shape = 'u32[]', space=smem, size = 0x4, offset = 0x4, fixed_abs, tag = 'smem constant byte address 0x4 - core index']
  #allocation1 [shape = 'u32[72,128]{1,0:T(1,128)}', space=vmem, size = 0x9000, scoped, tag = 'internal scratch']
  %s0 = inlined_call_operand.vmem [shape: f32[2,256], index: 0, kind: input, shape index: {}]
  %s1 = inlined_call_operand.vmem [shape: f32[256,32], index: 1, kind: input, shape index: {}]
  %s2 = inlined_call_operand.vmem [shape: f32[1,32], index: 2, kind: input, shape index: {}]
  %s3 = inlined_call_operand.vmem [shape: f32[32,32], index: 3, kind: input, shape index: {}]
  %s4 = inlined_call_operand.vmem [shape: f32[1,32], index: 4, kind: input, shape index: {}]
  %s5 = inlined_call_operand.hbm [shape: f32[2,32], index: 5, kind: output, shape index: {}]
  %s6 = sld [smem:[#allocation0]]
  $region30: #{one_encoder_forward.5} parent=0
    _
  %s8 = ssub.s32 1, %s6
  %s9 = scalar_select 0, %s8, %s6
  $region1: #{one_encoder_forward.5} parent=0
    #allocation2 [shape = 'u8[1024]{0}', space=vmem, size = 0x400, scoped, tag = 'output window, operand 0, single buffered']
    #allocation3 [shape = 's32[1]{0}', space=sflag, size = 0x4, scoped, tag = 'scoped memory for one_encoder_forward.5']
    %10 = vsyncpa [#allocation3], 0
    // Predicated region
    $region2: #{one_encoder_forward.5} parent=1 // pred_check
      _
    $region3: #{one_encoder_forward.5} parent=1 // pred_check_branch
      %12 = sbr.rel (0) target = $region5
    $region4: #{one_encoder_forward.5} parent=1 // pred_region
      _
    $region5: #{one_encoder_forward.5} parent=1 // pred_fallthru
      _
    // Predicated region
    $region6: #{one_encoder_forward.5} parent=1 // pred_check
      _
    $region7: #{one_encoder_forward.5} parent=1 // pred_check_branch
      %14 = sbr.rel (0) target = $region9
    $region8: #{one_encoder_forward.5} parent=1 // pred_region
      _
    $region9: #{one_encoder_forward.5} parent=1 // pred_fallthru
      _
    // Predicated region
    $region10: #{one_encoder_forward.5} parent=1 // pred_check
      _
    $region11: #{one_encoder_forward.5} parent=1 // pred_check_branch
      %16 = sbr.rel (0) target = $region13
    $region12: #{one_encoder_forward.5} parent=1 // pred_region
      _
    $region13: #{one_encoder_forward.5} parent=1 // pred_fallthru
      _
    // Predicated region
    $region14: #{one_encoder_forward.5} parent=1 // pred_check
      _
    $region15: #{one_encoder_forward.5} parent=1 // pred_check_branch
      %18 = sbr.rel (0) target = $region17
    $region16: #{one_encoder_forward.5} parent=1 // pred_region
      _
    $region17: #{one_encoder_forward.5} parent=1 // pred_fallthru
      _
    // Predicated region
    $region18: #{one_encoder_forward.5} parent=1 // pred_check
      _
    $region19: #{one_encoder_forward.5} parent=1 // pred_check_branch
      %20 = sbr.rel (0) target = $region21
    $region20: #{one_encoder_forward.5} parent=1 // pred_region
      _
    $region21: #{one_encoder_forward.5} parent=1 // pred_fallthru
      _
    %v21 = vld [vmem:[%s0] sm:$0xf]
    %v22 = vld [vmem:[%s1] sm:$0xff]
    %v23 = vld [vmem:[%s1 + $0x8] sm:$0xff]
    %v24 = vld [vmem:[%s1 + $0x10] sm:$0xff]
    %v25 = vld [vmem:[%s1 + $0x18] sm:$0xff]
    %v26 = vld [vmem:[%s1 + $0x20] sm:$0xff]
    %v27 = vld [vmem:[%s1 + $0x28] sm:$0xff]
    %v28 = vld [vmem:[%s1 + $0x30] sm:$0xff]
    %v29 = vld [vmem:[%s1 + $0x38] sm:$0xff]
    %v30 = vld [vmem:[%s1 + $0x40] sm:$0xff]
    %v31 = vld [vmem:[%s1 + $0x48] sm:$0xff]
    %v32 = vld [vmem:[%s1 + $0x50] sm:$0xff]
    %v33 = vld [vmem:[%s1 + $0x58] sm:$0xff]
    %v34 = vld [vmem:[%s1 + $0x60] sm:$0xff]
    %v35 = vld [vmem:[%s1 + $0x68] sm:$0xff]
    %v36 = vld [vmem:[%s1 + $0x70] sm:$0xff]
    %v37 = vld [vmem:[%s1 + $0x78] sm:$0xff]
    %v38 = vld [vmem:[%s1 + $0x80] sm:$0xff]
    %v39 = vld [vmem:[%s1 + $0x88] sm:$0xff]
    %v40 = vld [vmem:[%s1 + $0x90] sm:$0xff]
    %v41 = vld [vmem:[%s1 + $0x98] sm:$0xff]
    %v42 = vld [vmem:[%s1 + $0xa0] sm:$0xff]
    %v43 = vld [vmem:[%s1 + $0xa8] sm:$0xff]
    %v44 = vld [vmem:[%s1 + $0xb0] sm:$0xff]
    %v45 = vld [vmem:[%s1 + $0xb8] sm:$0xff]
    %v46 = vld [vmem:[%s1 + $0xc0] sm:$0xff]
    %v47 = vld [vmem:[%s1 + $0xc8] sm:$0xff]
    %v48 = vld [vmem:[%s1 + $0xd0] sm:$0xff]
    %v49 = vld [vmem:[%s1 + $0xd8] sm:$0xff]
    %v50 = vld [vmem:[%s1 + $0xe0] sm:$0xff]
    %v51 = vld [vmem:[%s1 + $0xe8] sm:$0xff]
    %v52 = vld [vmem:[%s1 + $0xf0] sm:$0xff]
    %v53 = vld [vmem:[%s1 + $0xf8] sm:$0xff]
    %v54 = vld [vmem:[%s2] sm:$0x1]
    %v56 = vperm.slane %v54, 0
    %59 = vst [vmem:[#allocation1] ss:$4 sm:$0xff] %v21
    %v60 = vld.sshfl [vmem:[#allocation1] sm:$0xff pattern:$0x73625140]
    %v61 = vld.sshfl [vmem:[#allocation1 + $0x8] sm:$0xff pattern:$0x73625140]
    %64 = vmatpush.msra.mxu0 %v37
    %65 = vmatpush.msra.mxu0 %v36
    %66 = vmatpush.msra.mxu0 %v35
    %67 = vmatpush.msra.mxu0 %v34
    %68 = vmatpush.msra.mxu0 %v33
    %69 = vmatpush.msra.mxu0 %v32
    %70 = vmatpush.msra.mxu0 %v31
    %71 = vmatpush.msra.mxu0 %v30
    %72 = vmatpush.msra.mxu0 %v29
    %73 = vmatpush.msra.mxu0 %v28
    %74 = vmatpush.msra.mxu0 %v27
    %75 = vmatpush.msra.mxu0 %v26
    %76 = vmatpush.msra.mxu0 %v25
    %77 = vmatpush.msra.mxu0 %v24
    %78 = vmatpush.msra.mxu0 %v23
    %79 = vmatpush.msra.mxu0 %v22
    %80 = vmatmul.f32.gmra.mxu0 %v60
    %v81 = vpop.f32.mrf.mxu0
    %v82 = vadd.f32 %v56, %v81
    %83 = vdwg.mxu0
    %84 = vmatpush.msra.mxu0 %v53
    %85 = vmatpush.msra.mxu0 %v52
    %86 = vmatpush.msra.mxu0 %v51
    %87 = vmatpush.msra.mxu0 %v50
    %88 = vmatpush.msra.mxu0 %v49
    %89 = vmatpush.msra.mxu0 %v48
    %90 = vmatpush.msra.mxu0 %v47
    %91 = vmatpush.msra.mxu0 %v46
    %92 = vmatpush.msra.mxu0 %v45
    %93 = vmatpush.msra.mxu0 %v44
    %94 = vmatpush.msra.mxu0 %v43
    %95 = vmatpush.msra.mxu0 %v42
    %96 = vmatpush.msra.mxu0 %v41
    %97 = vmatpush.msra.mxu0 %v40
    %98 = vmatpush.msra.mxu0 %v39
    %99 = vmatpush.msra.mxu0 %v38
    %100 = vmatmul.f32.gmra.mxu0 %v61
    %v101 = vpop.f32.mrf.mxu0
    %v102 = vadd.f32 %v82, %v101
    %103 = vdwg.mxu0
    %v104 = vmax.f32 %v102, 0.0
    %v105 = vld [vmem:[%s3] sm:$0xff]
    %v106 = vld [vmem:[%s3 + $0x8] sm:$0xff]
    %v107 = vld [vmem:[%s3 + $0x10] sm:$0xff]
    %v108 = vld [vmem:[%s3 + $0x18] sm:$0xff]
    %v109 = vld [vmem:[%s4] sm:$0x1]
    %v111 = vperm.slane %v109, 0
    %vm113 = vcmask 261120
    %v115 = vsel %vm113, %v104, 0
    %117 = vmatpush.msra.mxu0 0.0
    %118 = vmatpush.msra.mxu0 0.0
    %119 = vmatpush.msra.mxu0 0.0
    %120 = vmatpush.msra.mxu0 0.0
    %121 = vmatpush.msra.mxu0 0.0
    %122 = vmatpush.msra.mxu0 0.0
    %123 = vmatpush.msra.mxu0 0.0
    %124 = vmatpush.msra.mxu0 0.0
    %125 = vmatpush.msra.mxu0 0.0
    %126 = vmatpush.msra.mxu0 0.0
    %127 = vmatpush.msra.mxu0 0.0
    %128 = vmatpush.msra.mxu0 0.0
    %129 = vmatpush.msra.mxu0 %v108
    %130 = vmatpush.msra.mxu0 %v107
    %131 = vmatpush.msra.mxu0 %v106
    %132 = vmatpush.msra.mxu0 %v105
    %133 = vmatmul.f32.gmra.mxu0 %v115
    %v134 = vpop.f32.mrf.mxu0
    %v135 = vadd.f32 %v111, %v134
    %136 = vdwg.mxu0
    %v137 = vmax.f32 %v135, 0.0
    %vm138 = vcmask 254976
    %139 = vst.msk [vmem:[#allocation2] sm:$0x3] %vm138, %v137
    // Predicated region
    $region22: #{one_encoder_forward.5} parent=1 // pred_check
      _
    $region23: #{one_encoder_forward.5} parent=1 // pred_check_branch
      %141 = sbr.rel (0) target = $region25
    $region24: #{one_encoder_forward.5} parent=1 // pred_region
      %143 = vsyncadd [#allocation3], 0
      %s145 = sshll.u32 [#allocation2], 4
      %s146 = int_to_ptr.vmem [resolvable:$true] %s145
      %s147 = sshll.u32 %s5, 4
      %s148 = int_to_ptr.hbm [resolvable:$true] %s147
      %150 = dma.vmem_to_hbm [thread:$0]  %s146, 32, %s148, [#allocation3]
    $region25: #{one_encoder_forward.5} parent=1 // pred_fallthru
      _
    // Predicated region
    $region26: #{one_encoder_forward.5} parent=1 // pred_check
      _
    $region27: #{one_encoder_forward.5} parent=1 // pred_check_branch
      %152 = sbr.rel (0) target = $region29
    $region28: #{one_encoder_forward.5} parent=1 // pred_region
      %154 = dma.done [#allocation3], 32
    $region29: #{one_encoder_forward.5} parent=1 // pred_fallthru
      _
    %155 = vsyncpa [#allocation3], 1

</llo_original>
